<compile_context>
chip_gen: v7x
topology: tpu7x:2x2x1
jax: 0.10.0
libtpu: 0.0.40
codegen_flags: <defaults>
</compile_context>

<pallas_src>
import jax
import jax.numpy as jnp
from jax.experimental import pallas as pl
from jax.experimental.pallas import tpu as pltpu


def gru_chunk_kernel(x_ref,      # (Tc, B, H)  bf16: embedded inputs, this chunk
                     w_ih_ref,   # (H, 3H)     bf16, resident
                     w_hh_ref,   # (H, 3H)     bf16, resident
                     b_ih_ref,   # (1, 3H)     f32
                     b_hh_ref,   # (1, 3H)     f32
                     out_ref,    # (Tc, B, H)  f32 block of the (T, B, H) output
                     hid_ref,    # (B, H)      f32, resident, written on last chunk
                     h_ref,      # scratch (B, H)      f32: hidden carry across chunks
                     gi_ref):    # scratch (Tc, B, 3H) f32: per-chunk input->gates
    c = pl.program_id(0)
    n_c = pl.num_programs(0)
    Tc, B, H = x_ref.shape

    @pl.when(c == 0)
    def _init():
        h_ref[...] = jnp.zeros_like(h_ref)

    # Bulk input->gates matmul for the whole chunk: one M = Tc*B MXU matmul
    # (bf16 operands, f32 accumulation) instead of Tc tiny matmuls on the
    # serial critical path.
    x2d = x_ref[...].reshape(Tc * B, H)
    gi2d = (jnp.dot(x2d, w_ih_ref[...], preferred_element_type=jnp.float32)
            + b_ih_ref[...])
    gi_ref[...] = gi2d.reshape(Tc, B, 3 * H)

    w_hh = w_hh_ref[...]
    b_hh = b_hh_ref[...]

    def step(i, h):
        gi_t = gi_ref[i]                                           # (B, 3H)
        gh = (jnp.dot(h.astype(w_hh.dtype), w_hh,
                      preferred_element_type=jnp.float32) + b_hh)  # (B, 3H)
        # PyTorch GRU gate ordering: r, z, n (b_hn stays inside the r product).
        r = jax.nn.sigmoid(gi_t[:, 0 * H:1 * H] + gh[:, 0 * H:1 * H])
        z = jax.nn.sigmoid(gi_t[:, 1 * H:2 * H] + gh[:, 1 * H:2 * H])
        n = jnp.tanh(gi_t[:, 2 * H:3 * H] + r * gh[:, 2 * H:3 * H])
        h_new = (1.0 - z) * n + z * h
        out_ref[i] = h_new.astype(out_ref.dtype)
        return h_new

    # Hidden state rides in vregs across the Tc serial steps; only one VMEM
    # load/store of h per chunk.
    h_final = jax.lax.fori_loop(0, Tc, step, h_ref[...], unroll=True)
    h_ref[...] = h_final

    @pl.when(c == n_c - 1)
    def _fin():
        hid_ref[...] = h_final.astype(hid_ref.dtype)


def encoder_rnn_forward(tokens, params, time_chunk=8):
    """tokens: (B, T) int32. Returns (output (B, T, H), hidden (1, B, H))."""
    emb = params["embedding"].astype(jnp.float32)             # (V, H)
    w_ih_t = params["w_ih"].T.astype(jnp.bfloat16)             # (H, 3H)
    w_hh_t = params["w_hh"].T.astype(jnp.bfloat16)             # (H, 3H)
    b_ih = params["b_ih"].reshape(1, -1).astype(jnp.float32)   # (1, 3H)
    b_hh = params["b_hh"].reshape(1, -1).astype(jnp.float32)   # (1, 3H)

    B, T = tokens.shape
    V, H = emb.shape
    G = 3 * H

    # Embedding lookup + (eval-mode) dropout outside the kernel: no (V, H)
    # table in VMEM, no in-kernel row gather.  Cast to bf16 once (the matmul
    # operand dtype anyway) to halve streamed-chunk DMA traffic.
    # TODO(synk): training-mode dropout would apply a bernoulli mask here (or
    # in-kernel via pltpu.prng_seed + pltpu.stateful_bernoulli).
    x_tm = jnp.transpose(emb[tokens], (1, 0, 2)).astype(jnp.bfloat16)  # (T, B, H)

    # Time-chunk size: largest divisor of T that is <= time_chunk.
    Tc = max(1, min(time_chunk, T))
    while T % Tc:
        Tc -= 1
    n_chunks = T // Tc

    grid_spec = pltpu.PrefetchScalarGridSpec(
        num_scalar_prefetch=0,
        grid=(n_chunks,),
        in_specs=[
            pl.BlockSpec((Tc, B, H), lambda c: (c, 0, 0)),   # x chunk (streamed)
            pl.BlockSpec((H, G), lambda c: (0, 0)),          # W_ih^T (resident)
            pl.BlockSpec((H, G), lambda c: (0, 0)),          # W_hh^T (resident)
            pl.BlockSpec((1, G), lambda c: (0, 0)),          # b_ih
            pl.BlockSpec((1, G), lambda c: (0, 0)),          # b_hh
        ],
        out_specs=(
            pl.BlockSpec((Tc, B, H), lambda c: (c, 0, 0)),   # per-chunk hiddens
            pl.BlockSpec((B, H), lambda c: (0, 0)),          # final hidden (resident)
        ),
        scratch_shapes=[
            pltpu.VMEM((B, H), jnp.float32),        # hidden carry across chunks
            pltpu.VMEM((Tc, B, G), jnp.float32),    # per-chunk GI = X @ W_ih + b_ih
        ],
    )

    # Generation-aware VMEM budget: actual residents + double-buffered chunk
    # tiles + scratches, with headroom, capped by the reported VMEM capacity.
    need = (
        2 * 2 * (H * G * 2)               # W_ih, W_hh bf16, double-buffered
        + 2 * 2 * (G * 4)                 # biases f32, double-buffered
        + 2 * (Tc * B * H * 2)            # x chunk bf16, double-buffered
        + 2 * (Tc * B * H * 4)            # out chunk f32, double-buffered
        + 2 * (B * H * 4)                 # final-hidden block
        + (B * H * 4) + (Tc * B * G * 4)  # scratches
    )
    try:
        vmem_cap = int(pltpu.get_tpu_info().vmem_capacity_bytes)
    except Exception:
        vmem_cap = 64 * 1024 * 1024       # conservative (v7x) fallback
    vmem_limit = int(min(max(2 * need + (4 << 20), 16 << 20),
                         (3 * vmem_cap) // 4))

    out_tm, h_last = pl.pallas_call(
        gru_chunk_kernel,
        grid_spec=grid_spec,
        out_shape=(
            jax.ShapeDtypeStruct((T, B, H), jnp.float32),
            jax.ShapeDtypeStruct((B, H), jnp.float32),
        ),
        compiler_params=pltpu.CompilerParams(
            dimension_semantics=("arbitrary",),   # recurrence -> serial grid axis
            vmem_limit_bytes=vmem_limit,
        ),
    )(x_tm, w_ih_t, w_hh_t, b_ih, b_hh)

    # Tiny layout-only fixups (for large shapes keep time-major downstream or
    # fuse the transpose into the consumer).
    output = jnp.transpose(out_tm, (1, 0, 2))   # (B, T, H), batch_first
    hidden = h_last[None, :, :]                 # (1, B, H)
    return output, hidden


def reference_forward(tokens, params):
    """Pure-JAX reference of the same math (eval-mode dropout, same bf16
    weight/activation quantization with f32 accumulation as the kernel)."""
    emb = params["embedding"].astype(jnp.float32)
    w_ih = params["w_ih"].T.astype(jnp.bfloat16)   # (H, 3H)
    w_hh = params["w_hh"].T.astype(jnp.bfloat16)   # (H, 3H)
    b_ih = params["b_ih"].astype(jnp.float32)
    b_hh = params["b_hh"].astype(jnp.float32)
    B, T = tokens.shape
    H = emb.shape[1]
    x_seq = emb[tokens]                            # (B, T, H)

    def step(h, x):
        gi = jnp.dot(x.astype(jnp.bfloat16), w_ih,
                     preferred_element_type=jnp.float32) + b_ih
        gh = jnp.dot(h.astype(jnp.bfloat16), w_hh,
                     preferred_element_type=jnp.float32) + b_hh
        r = jax.nn.sigmoid(gi[:, :H] + gh[:, :H])
        z = jax.nn.sigmoid(gi[:, H:2 * H] + gh[:, H:2 * H])
        n = jnp.tanh(gi[:, 2 * H:] + r * gh[:, 2 * H:])
        h_new = (1.0 - z) * n + z * h
        return h_new, h_new

    h0 = jnp.zeros((B, H), jnp.float32)
    h_last, outs = jax.lax.scan(step, h0, jnp.transpose(x_seq, (1, 0, 2)))
    return jnp.transpose(outs, (1, 0, 2)), h_last[None]


def init_params(key, input_size, hidden_size):
    k_emb, k1, k2, k3, k4 = jax.random.split(key, 5)
    bound = 1.0 / jnp.sqrt(hidden_size)
    return {
        # nn.Embedding default init: N(0, 1)
        "embedding": jax.random.normal(k_emb, (input_size, hidden_size), jnp.float32),
        # nn.GRU default init: U(-1/sqrt(H), 1/sqrt(H))
        "w_ih": jax.random.uniform(k1, (3 * hidden_size, hidden_size),
                                   jnp.float32, -bound, bound),
        "w_hh": jax.random.uniform(k2, (3 * hidden_size, hidden_size),
                                   jnp.float32, -bound, bound),
        "b_ih": jax.random.uniform(k3, (3 * hidden_size,),
                                   jnp.float32, -bound, bound),
        "b_hh": jax.random.uniform(k4, (3 * hidden_size,),
                                   jnp.float32, -bound, bound),
    }


if __name__ == "__main__":
    INPUT_SIZE = 32   # vocab size
    HIDDEN = 32
    B, T = 2, 8

    key = jax.random.PRNGKey(0)
    k_params, k_tok = jax.random.split(key)
    params = init_params(k_params, INPUT_SIZE, HIDDEN)
    tokens = jax.random.randint(k_tok, (B, T), 0, INPUT_SIZE, dtype=jnp.int32)

    output, hidden = encoder_rnn_forward(tokens, params)
    output = jax.block_until_ready(output)
    hidden = jax.block_until_ready(hidden)

    assert output.shape == (B, T, HIDDEN), output.shape
    assert hidden.shape == (1, B, HIDDEN), hidden.shape

    ref_out, ref_hid = reference_forward(tokens, params)
    assert jnp.allclose(output, ref_out, atol=1e-2, rtol=1e-2)
    assert jnp.allclose(hidden, ref_hid, atol=1e-2, rtol=1e-2)

    print("KERNEL_OK")
</pallas_src>

<mosaic_0001>
module attributes {stable_mosaic.version = 11 : i64} {
  func.func @gru_chunk_kernel(%arg0: i32, %arg1: memref<8x2x32xbf16, #tpu.memory_space<vmem>>, %arg2: memref<32x96xbf16, #tpu.memory_space<vmem>>, %arg3: memref<32x96xbf16, #tpu.memory_space<vmem>>, %arg4: memref<1x96xf32, #tpu.memory_space<vmem>>, %arg5: memref<1x96xf32, #tpu.memory_space<vmem>>, %arg6: memref<8x2x32xf32, #tpu.memory_space<vmem>>, %arg7: memref<2x32xf32, #tpu.memory_space<vmem>>, %arg8: memref<2x32xf32, #tpu.memory_space<vmem>>, %arg9: memref<8x2x96xf32, #tpu.memory_space<vmem>>) attributes {dimension_semantics = [#tpu.dimension_semantics<arbitrary>], iteration_bounds = array<i64: 1>, scalar_prefetch = 0 : i64, scratch_operands = 2 : i64, tpu.core_type = #tpu.core_type<tc>, window_params = [{transform_indices = @transform_0, window_bounds = array<i64: 8, 2, 32>}, {pipeline_mode = #tpu.pipeline_mode<synchronous>, transform_indices = @transform_1, window_bounds = array<i64: 32, 96>}, {pipeline_mode = #tpu.pipeline_mode<synchronous>, transform_indices = @transform_2, window_bounds = array<i64: 32, 96>}, {pipeline_mode = #tpu.pipeline_mode<synchronous>, transform_indices = @transform_3, window_bounds = array<i64: 1, 96>}, {pipeline_mode = #tpu.pipeline_mode<synchronous>, transform_indices = @transform_4, window_bounds = array<i64: 1, 96>}, {transform_indices = @transform_5, window_bounds = array<i64: 8, 2, 32>}, {pipeline_mode = #tpu.pipeline_mode<synchronous>, transform_indices = @transform_6, window_bounds = array<i64: 2, 32>}]} {
    %c0_i32 = arith.constant 0 : i32
    %0 = arith.cmpi eq, %arg0, %c0_i32 : i32
    %1 = arith.extui %0 : i1 to i32
    %c0_i32_0 = arith.constant 0 : i32
    %2 = arith.cmpi ne, %1, %c0_i32_0 : i32
    scf.if %2 {
      %cst_85 = arith.constant 0.000000e+00 : f32
      %315 = vector.broadcast %cst_85 : f32 to vector<2x32xf32>
      %c0_86 = arith.constant 0 : index
      %c0_87 = arith.constant 0 : index
      %316 = vector.load %arg8[%c0_86, %c0_87] : memref<2x32xf32, #tpu.memory_space<vmem>>, vector<2x32xf32>
      tpu.vector_store %arg8[%c0_86, %c0_87], %315 {strides = array<i32>} : memref<2x32xf32, #tpu.memory_space<vmem>>, vector<2x32xf32>,
    } else {
    }
    %c0 = arith.constant 0 : index
    %c0_1 = arith.constant 0 : index
    %c0_2 = arith.constant 0 : index
    %3 = vector.load %arg1[%c0, %c0_1, %c0_2] : memref<8x2x32xbf16, #tpu.memory_space<vmem>>, vector<8x2x32xbf16>
    %4 = vector.shape_cast %3 : vector<8x2x32xbf16> to vector<16x32xbf16>
    %c0_3 = arith.constant 0 : index
    %c0_4 = arith.constant 0 : index
    %5 = vector.load %arg2[%c0_3, %c0_4] : memref<32x96xbf16, #tpu.memory_space<vmem>>, vector<32x96xbf16>
    %cst = arith.constant dense<0.000000e+00> : vector<16x96xf32>
    %6 = tpu.matmul %4, %5, %cst {dimension_numbers = #tpu.dot_dimension_numbers<[1], [0], [0], [1], [0, 0, 1, 1], [], []>} : vector<16x32xbf16>, vector<32x96xbf16>, vector<16x96xf32> -> vector<16x96xf32>
    %c0_5 = arith.constant 0 : index
    %c0_6 = arith.constant 0 : index
    %7 = vector.load %arg4[%c0_5, %c0_6] : memref<1x96xf32, #tpu.memory_space<vmem>>, vector<1x96xf32>
    %8 = vector.broadcast %7 : vector<1x96xf32> to vector<16x96xf32>
    %9 = arith.addf %6, %8 : vector<16x96xf32>
    %10 = vector.shape_cast %9 : vector<16x96xf32> to vector<8x2x96xf32>
    %c0_7 = arith.constant 0 : index
    %c0_8 = arith.constant 0 : index
    %c0_9 = arith.constant 0 : index
    %11 = vector.load %arg9[%c0_7, %c0_8, %c0_9] : memref<8x2x96xf32, #tpu.memory_space<vmem>>, vector<8x2x96xf32>
    tpu.vector_store %arg9[%c0_7, %c0_8, %c0_9], %10 {strides = array<i32>} : memref<8x2x96xf32, #tpu.memory_space<vmem>>, vector<8x2x96xf32>,
    %c0_10 = arith.constant 0 : index
    %c0_11 = arith.constant 0 : index
    %12 = vector.load %arg3[%c0_10, %c0_11] : memref<32x96xbf16, #tpu.memory_space<vmem>>, vector<32x96xbf16>
    %c0_12 = arith.constant 0 : index
    %c0_13 = arith.constant 0 : index
    %13 = vector.load %arg5[%c0_12, %c0_13] : memref<1x96xf32, #tpu.memory_space<vmem>>, vector<1x96xf32>
    %c0_14 = arith.constant 0 : index
    %c0_15 = arith.constant 0 : index
    %14 = vector.load %arg8[%c0_14, %c0_15] : memref<2x32xf32, #tpu.memory_space<vmem>>, vector<2x32xf32>
    %c0_i32_16 = arith.constant 0 : i32
    %15 = arith.index_cast %c0_i32_16 : i32 to index
    %c0_17 = arith.constant 0 : index
    %c0_18 = arith.constant 0 : index
    %16 = vector.load %arg9[%15, %c0_17, %c0_18] : memref<8x2x96xf32, #tpu.memory_space<vmem>>, vector<1x2x96xf32>
    %17 = vector.shape_cast %16 : vector<1x2x96xf32> to vector<2x96xf32>
    %18 = arith.truncf %14 : vector<2x32xf32> to vector<2x32xbf16>
    %cst_19 = arith.constant dense<0.000000e+00> : vector<2x96xf32>
    %19 = tpu.matmul %18, %12, %cst_19 {dimension_numbers = #tpu.dot_dimension_numbers<[1], [0], [0], [1], [0, 0, 1, 1], [], []>} : vector<2x32xbf16>, vector<32x96xbf16>, vector<2x96xf32> -> vector<2x96xf32>
    %20 = vector.broadcast %13 : vector<1x96xf32> to vector<2x96xf32>
    %21 = arith.addf %19, %20 : vector<2x96xf32>
    %22 = vector.extract_strided_slice %17 {offsets = [0, 0], sizes = [2, 32], strides = [1, 1]} : vector<2x96xf32> to vector<2x32xf32>
    %23 = vector.extract_strided_slice %21 {offsets = [0, 0], sizes = [2, 32], strides = [1, 1]} : vector<2x96xf32> to vector<2x32xf32>
    %24 = arith.addf %22, %23 : vector<2x32xf32>
    %25 = arith.negf %24 : vector<2x32xf32>
    %26 = math.exp %25 : vector<2x32xf32>
    %cst_20 = arith.constant 1.000000e+00 : f32
    %27 = vector.broadcast %cst_20 : f32 to vector<2x32xf32>
    %28 = arith.addf %27, %26 : vector<2x32xf32>
    %29 = arith.divf %27, %28 : vector<2x32xf32>
    %30 = vector.extract_strided_slice %17 {offsets = [0, 32], sizes = [2, 32], strides = [1, 1]} : vector<2x96xf32> to vector<2x32xf32>
    %31 = vector.extract_strided_slice %21 {offsets = [0, 32], sizes = [2, 32], strides = [1, 1]} : vector<2x96xf32> to vector<2x32xf32>
    %32 = arith.addf %30, %31 : vector<2x32xf32>
    %33 = arith.negf %32 : vector<2x32xf32>
    %34 = math.exp %33 : vector<2x32xf32>
    %cst_21 = arith.constant 1.000000e+00 : f32
    %35 = vector.broadcast %cst_21 : f32 to vector<2x32xf32>
    %36 = arith.addf %35, %34 : vector<2x32xf32>
    %37 = arith.divf %35, %36 : vector<2x32xf32>
    %38 = vector.extract_strided_slice %17 {offsets = [0, 64], sizes = [2, 32], strides = [1, 1]} : vector<2x96xf32> to vector<2x32xf32>
    %39 = vector.extract_strided_slice %21 {offsets = [0, 64], sizes = [2, 32], strides = [1, 1]} : vector<2x96xf32> to vector<2x32xf32>
    %40 = arith.mulf %29, %39 : vector<2x32xf32>
    %41 = arith.addf %38, %40 : vector<2x32xf32>
    %42 = math.tanh %41 : vector<2x32xf32>
    %cst_22 = arith.constant 1.000000e+00 : f32
    %43 = vector.broadcast %cst_22 : f32 to vector<2x32xf32>
    %44 = arith.subf %43, %37 : vector<2x32xf32>
    %45 = arith.mulf %44, %42 : vector<2x32xf32>
    %46 = arith.mulf %37, %14 : vector<2x32xf32>
    %47 = arith.addf %45, %46 : vector<2x32xf32>
    %48 = arith.index_cast %c0_i32_16 : i32 to index
    %c0_23 = arith.constant 0 : index
    %c0_24 = arith.constant 0 : index
    %49 = vector.load %arg6[%48, %c0_23, %c0_24] : memref<8x2x32xf32, #tpu.memory_space<vmem>>, vector<1x2x32xf32>
    %50 = vector.shape_cast %49 : vector<1x2x32xf32> to vector<2x32xf32>
    %51 = vector.shape_cast %47 : vector<2x32xf32> to vector<1x2x32xf32>
    tpu.vector_store %arg6[%48, %c0_23, %c0_24], %51 {strides = array<i32>} : memref<8x2x32xf32, #tpu.memory_space<vmem>>, vector<1x2x32xf32>,
    %c1_i32 = arith.constant 1 : i32
    %52 = arith.index_cast %c1_i32 : i32 to index
    %c0_25 = arith.constant 0 : index
    %c0_26 = arith.constant 0 : index
    %53 = vector.load %arg9[%52, %c0_25, %c0_26] : memref<8x2x96xf32, #tpu.memory_space<vmem>>, vector<1x2x96xf32>
    %54 = vector.shape_cast %53 : vector<1x2x96xf32> to vector<2x96xf32>
    %55 = arith.truncf %47 : vector<2x32xf32> to vector<2x32xbf16>
    %cst_27 = arith.constant dense<0.000000e+00> : vector<2x96xf32>
    %56 = tpu.matmul %55, %12, %cst_27 {dimension_numbers = #tpu.dot_dimension_numbers<[1], [0], [0], [1], [0, 0, 1, 1], [], []>} : vector<2x32xbf16>, vector<32x96xbf16>, vector<2x96xf32> -> vector<2x96xf32>
    %57 = vector.broadcast %13 : vector<1x96xf32> to vector<2x96xf32>
    %58 = arith.addf %56, %57 : vector<2x96xf32>
    %59 = vector.extract_strided_slice %54 {offsets = [0, 0], sizes = [2, 32], strides = [1, 1]} : vector<2x96xf32> to vector<2x32xf32>
    %60 = vector.extract_strided_slice %58 {offsets = [0, 0], sizes = [2, 32], strides = [1, 1]} : vector<2x96xf32> to vector<2x32xf32>
    %61 = arith.addf %59, %60 : vector<2x32xf32>
    %62 = arith.negf %61 : vector<2x32xf32>
    %63 = math.exp %62 : vector<2x32xf32>
    %cst_28 = arith.constant 1.000000e+00 : f32
    %64 = vector.broadcast %cst_28 : f32 to vector<2x32xf32>
    %65 = arith.addf %64, %63 : vector<2x32xf32>
    %66 = arith.divf %64, %65 : vector<2x32xf32>
    %67 = vector.extract_strided_slice %54 {offsets = [0, 32], sizes = [2, 32], strides = [1, 1]} : vector<2x96xf32> to vector<2x32xf32>
    %68 = vector.extract_strided_slice %58 {offsets = [0, 32], sizes = [2, 32], strides = [1, 1]} : vector<2x96xf32> to vector<2x32xf32>
    %69 = arith.addf %67, %68 : vector<2x32xf32>
    %70 = arith.negf %69 : vector<2x32xf32>
    %71 = math.exp %70 : vector<2x32xf32>
    %cst_29 = arith.constant 1.000000e+00 : f32
    %72 = vector.broadcast %cst_29 : f32 to vector<2x32xf32>
    %73 = arith.addf %72, %71 : vector<2x32xf32>
    %74 = arith.divf %72, %73 : vector<2x32xf32>
    %75 = vector.extract_strided_slice %54 {offsets = [0, 64], sizes = [2, 32], strides = [1, 1]} : vector<2x96xf32> to vector<2x32xf32>
    %76 = vector.extract_strided_slice %58 {offsets = [0, 64], sizes = [2, 32], strides = [1, 1]} : vector<2x96xf32> to vector<2x32xf32>
    %77 = arith.mulf %66, %76 : vector<2x32xf32>
    %78 = arith.addf %75, %77 : vector<2x32xf32>
    %79 = math.tanh %78 : vector<2x32xf32>
    %cst_30 = arith.constant 1.000000e+00 : f32
    %80 = vector.broadcast %cst_30 : f32 to vector<2x32xf32>
    %81 = arith.subf %80, %74 : vector<2x32xf32>
    %82 = arith.mulf %81, %79 : vector<2x32xf32>
    %83 = arith.mulf %74, %47 : vector<2x32xf32>
    %84 = arith.addf %82, %83 : vector<2x32xf32>
    %85 = arith.index_cast %c1_i32 : i32 to index
    %c0_31 = arith.constant 0 : index
    %c0_32 = arith.constant 0 : index
    %86 = vector.load %arg6[%85, %c0_31, %c0_32] : memref<8x2x32xf32, #tpu.memory_space<vmem>>, vector<1x2x32xf32>
    %87 = vector.shape_cast %86 : vector<1x2x32xf32> to vector<2x32xf32>
    %88 = vector.shape_cast %84 : vector<2x32xf32> to vector<1x2x32xf32>
    tpu.vector_store %arg6[%85, %c0_31, %c0_32], %88 {strides = array<i32>} : memref<8x2x32xf32, #tpu.memory_space<vmem>>, vector<1x2x32xf32>,
    %c2_i32 = arith.constant 2 : i32
    %89 = arith.index_cast %c2_i32 : i32 to index
    %c0_33 = arith.constant 0 : index
    %c0_34 = arith.constant 0 : index
    %90 = vector.load %arg9[%89, %c0_33, %c0_34] : memref<8x2x96xf32, #tpu.memory_space<vmem>>, vector<1x2x96xf32>
    %91 = vector.shape_cast %90 : vector<1x2x96xf32> to vector<2x96xf32>
    %92 = arith.truncf %84 : vector<2x32xf32> to vector<2x32xbf16>
    %cst_35 = arith.constant dense<0.000000e+00> : vector<2x96xf32>
    %93 = tpu.matmul %92, %12, %cst_35 {dimension_numbers = #tpu.dot_dimension_numbers<[1], [0], [0], [1], [0, 0, 1, 1], [], []>} : vector<2x32xbf16>, vector<32x96xbf16>, vector<2x96xf32> -> vector<2x96xf32>
    %94 = vector.broadcast %13 : vector<1x96xf32> to vector<2x96xf32>
    %95 = arith.addf %93, %94 : vector<2x96xf32>
    %96 = vector.extract_strided_slice %91 {offsets = [0, 0], sizes = [2, 32], strides = [1, 1]} : vector<2x96xf32> to vector<2x32xf32>
    %97 = vector.extract_strided_slice %95 {offsets = [0, 0], sizes = [2, 32], strides = [1, 1]} : vector<2x96xf32> to vector<2x32xf32>
    %98 = arith.addf %96, %97 : vector<2x32xf32>
    %99 = arith.negf %98 : vector<2x32xf32>
    %100 = math.exp %99 : vector<2x32xf32>
    %cst_36 = arith.constant 1.000000e+00 : f32
    %101 = vector.broadcast %cst_36 : f32 to vector<2x32xf32>
    %102 = arith.addf %101, %100 : vector<2x32xf32>
    %103 = arith.divf %101, %102 : vector<2x32xf32>
    %104 = vector.extract_strided_slice %91 {offsets = [0, 32], sizes = [2, 32], strides = [1, 1]} : vector<2x96xf32> to vector<2x32xf32>
    %105 = vector.extract_strided_slice %95 {offsets = [0, 32], sizes = [2, 32], strides = [1, 1]} : vector<2x96xf32> to vector<2x32xf32>
    %106 = arith.addf %104, %105 : vector<2x32xf32>
    %107 = arith.negf %106 : vector<2x32xf32>
    %108 = math.exp %107 : vector<2x32xf32>
    %cst_37 = arith.constant 1.000000e+00 : f32
    %109 = vector.broadcast %cst_37 : f32 to vector<2x32xf32>
    %110 = arith.addf %109, %108 : vector<2x32xf32>
    %111 = arith.divf %109, %110 : vector<2x32xf32>
    %112 = vector.extract_strided_slice %91 {offsets = [0, 64], sizes = [2, 32], strides = [1, 1]} : vector<2x96xf32> to vector<2x32xf32>
    %113 = vector.extract_strided_slice %95 {offsets = [0, 64], sizes = [2, 32], strides = [1, 1]} : vector<2x96xf32> to vector<2x32xf32>
    %114 = arith.mulf %103, %113 : vector<2x32xf32>
    %115 = arith.addf %112, %114 : vector<2x32xf32>
    %116 = math.tanh %115 : vector<2x32xf32>
    %cst_38 = arith.constant 1.000000e+00 : f32
    %117 = vector.broadcast %cst_38 : f32 to vector<2x32xf32>
    %118 = arith.subf %117, %111 : vector<2x32xf32>
    %119 = arith.mulf %118, %116 : vector<2x32xf32>
    %120 = arith.mulf %111, %84 : vector<2x32xf32>
    %121 = arith.addf %119, %120 : vector<2x32xf32>
    %122 = arith.index_cast %c2_i32 : i32 to index
    %c0_39 = arith.constant 0 : index
    %c0_40 = arith.constant 0 : index
    %123 = vector.load %arg6[%122, %c0_39, %c0_40] : memref<8x2x32xf32, #tpu.memory_space<vmem>>, vector<1x2x32xf32>
    %124 = vector.shape_cast %123 : vector<1x2x32xf32> to vector<2x32xf32>
    %125 = vector.shape_cast %121 : vector<2x32xf32> to vector<1x2x32xf32>
    tpu.vector_store %arg6[%122, %c0_39, %c0_40], %125 {strides = array<i32>} : memref<8x2x32xf32, #tpu.memory_space<vmem>>, vector<1x2x32xf32>,
    %c3_i32 = arith.constant 3 : i32
    %126 = arith.index_cast %c3_i32 : i32 to index
    %c0_41 = arith.constant 0 : index
    %c0_42 = arith.constant 0 : index
    %127 = vector.load %arg9[%126, %c0_41, %c0_42] : memref<8x2x96xf32, #tpu.memory_space<vmem>>, vector<1x2x96xf32>
    %128 = vector.shape_cast %127 : vector<1x2x96xf32> to vector<2x96xf32>
    %129 = arith.truncf %121 : vector<2x32xf32> to vector<2x32xbf16>
    %cst_43 = arith.constant dense<0.000000e+00> : vector<2x96xf32>
    %130 = tpu.matmul %129, %12, %cst_43 {dimension_numbers = #tpu.dot_dimension_numbers<[1], [0], [0], [1], [0, 0, 1, 1], [], []>} : vector<2x32xbf16>, vector<32x96xbf16>, vector<2x96xf32> -> vector<2x96xf32>
    %131 = vector.broadcast %13 : vector<1x96xf32> to vector<2x96xf32>
    %132 = arith.addf %130, %131 : vector<2x96xf32>
    %133 = vector.extract_strided_slice %128 {offsets = [0, 0], sizes = [2, 32], strides = [1, 1]} : vector<2x96xf32> to vector<2x32xf32>
    %134 = vector.extract_strided_slice %132 {offsets = [0, 0], sizes = [2, 32], strides = [1, 1]} : vector<2x96xf32> to vector<2x32xf32>
    %135 = arith.addf %133, %134 : vector<2x32xf32>
    %136 = arith.negf %135 : vector<2x32xf32>
    %137 = math.exp %136 : vector<2x32xf32>
    %cst_44 = arith.constant 1.000000e+00 : f32
    %138 = vector.broadcast %cst_44 : f32 to vector<2x32xf32>
    %139 = arith.addf %138, %137 : vector<2x32xf32>
    %140 = arith.divf %138, %139 : vector<2x32xf32>
    %141 = vector.extract_strided_slice %128 {offsets = [0, 32], sizes = [2, 32], strides = [1, 1]} : vector<2x96xf32> to vector<2x32xf32>
    %142 = vector.extract_strided_slice %132 {offsets = [0, 32], sizes = [2, 32], strides = [1, 1]} : vector<2x96xf32> to vector<2x32xf32>
    %143 = arith.addf %141, %142 : vector<2x32xf32>
    %144 = arith.negf %143 : vector<2x32xf32>
    %145 = math.exp %144 : vector<2x32xf32>
    %cst_45 = arith.constant 1.000000e+00 : f32
    %146 = vector.broadcast %cst_45 : f32 to vector<2x32xf32>
    %147 = arith.addf %146, %145 : vector<2x32xf32>
    %148 = arith.divf %146, %147 : vector<2x32xf32>
    %149 = vector.extract_strided_slice %128 {offsets = [0, 64], sizes = [2, 32], strides = [1, 1]} : vector<2x96xf32> to vector<2x32xf32>
    %150 = vector.extract_strided_slice %132 {offsets = [0, 64], sizes = [2, 32], strides = [1, 1]} : vector<2x96xf32> to vector<2x32xf32>
    %151 = arith.mulf %140, %150 : vector<2x32xf32>
    %152 = arith.addf %149, %151 : vector<2x32xf32>
    %153 = math.tanh %152 : vector<2x32xf32>
    %cst_46 = arith.constant 1.000000e+00 : f32
    %154 = vector.broadcast %cst_46 : f32 to vector<2x32xf32>
    %155 = arith.subf %154, %148 : vector<2x32xf32>
    %156 = arith.mulf %155, %153 : vector<2x32xf32>
    %157 = arith.mulf %148, %121 : vector<2x32xf32>
    %158 = arith.addf %156, %157 : vector<2x32xf32>
    %159 = arith.index_cast %c3_i32 : i32 to index
    %c0_47 = arith.constant 0 : index
    %c0_48 = arith.constant 0 : index
    %160 = vector.load %arg6[%159, %c0_47, %c0_48] : memref<8x2x32xf32, #tpu.memory_space<vmem>>, vector<1x2x32xf32>
    %161 = vector.shape_cast %160 : vector<1x2x32xf32> to vector<2x32xf32>
    %162 = vector.shape_cast %158 : vector<2x32xf32> to vector<1x2x32xf32>
    tpu.vector_store %arg6[%159, %c0_47, %c0_48], %162 {strides = array<i32>} : memref<8x2x32xf32, #tpu.memory_space<vmem>>, vector<1x2x32xf32>,
    %c4_i32 = arith.constant 4 : i32
    %163 = arith.index_cast %c4_i32 : i32 to index
    %c0_49 = arith.constant 0 : index
    %c0_50 = arith.constant 0 : index
    %164 = vector.load %arg9[%163, %c0_49, %c0_50] : memref<8x2x96xf32, #tpu.memory_space<vmem>>, vector<1x2x96xf32>
    %165 = vector.shape_cast %164 : vector<1x2x96xf32> to vector<2x96xf32>
    %166 = arith.truncf %158 : vector<2x32xf32> to vector<2x32xbf16>
    %cst_51 = arith.constant dense<0.000000e+00> : vector<2x96xf32>
    %167 = tpu.matmul %166, %12, %cst_51 {dimension_numbers = #tpu.dot_dimension_numbers<[1], [0], [0], [1], [0, 0, 1, 1], [], []>} : vector<2x32xbf16>, vector<32x96xbf16>, vector<2x96xf32> -> vector<2x96xf32>
    %168 = vector.broadcast %13 : vector<1x96xf32> to vector<2x96xf32>
    %169 = arith.addf %167, %168 : vector<2x96xf32>
    %170 = vector.extract_strided_slice %165 {offsets = [0, 0], sizes = [2, 32], strides = [1, 1]} : vector<2x96xf32> to vector<2x32xf32>
    %171 = vector.extract_strided_slice %169 {offsets = [0, 0], sizes = [2, 32], strides = [1, 1]} : vector<2x96xf32> to vector<2x32xf32>
    %172 = arith.addf %170, %171 : vector<2x32xf32>
    %173 = arith.negf %172 : vector<2x32xf32>
    %174 = math.exp %173 : vector<2x32xf32>
    %cst_52 = arith.constant 1.000000e+00 : f32
    %175 = vector.broadcast %cst_52 : f32 to vector<2x32xf32>
    %176 = arith.addf %175, %174 : vector<2x32xf32>
    %177 = arith.divf %175, %176 : vector<2x32xf32>
    %178 = vector.extract_strided_slice %165 {offsets = [0, 32], sizes = [2, 32], strides = [1, 1]} : vector<2x96xf32> to vector<2x32xf32>
    %179 = vector.extract_strided_slice %169 {offsets = [0, 32], sizes = [2, 32], strides = [1, 1]} : vector<2x96xf32> to vector<2x32xf32>
    %180 = arith.addf %178, %179 : vector<2x32xf32>
    %181 = arith.negf %180 : vector<2x32xf32>
    %182 = math.exp %181 : vector<2x32xf32>
    %cst_53 = arith.constant 1.000000e+00 : f32
    %183 = vector.broadcast %cst_53 : f32 to vector<2x32xf32>
    %184 = arith.addf %183, %182 : vector<2x32xf32>
    %185 = arith.divf %183, %184 : vector<2x32xf32>
    %186 = vector.extract_strided_slice %165 {offsets = [0, 64], sizes = [2, 32], strides = [1, 1]} : vector<2x96xf32> to vector<2x32xf32>
    %187 = vector.extract_strided_slice %169 {offsets = [0, 64], sizes = [2, 32], strides = [1, 1]} : vector<2x96xf32> to vector<2x32xf32>
    %188 = arith.mulf %177, %187 : vector<2x32xf32>
    %189 = arith.addf %186, %188 : vector<2x32xf32>
    %190 = math.tanh %189 : vector<2x32xf32>
    %cst_54 = arith.constant 1.000000e+00 : f32
    %191 = vector.broadcast %cst_54 : f32 to vector<2x32xf32>
    %192 = arith.subf %191, %185 : vector<2x32xf32>
    %193 = arith.mulf %192, %190 : vector<2x32xf32>
    %194 = arith.mulf %185, %158 : vector<2x32xf32>
    %195 = arith.addf %193, %194 : vector<2x32xf32>
    %196 = arith.index_cast %c4_i32 : i32 to index
    %c0_55 = arith.constant 0 : index
    %c0_56 = arith.constant 0 : index
    %197 = vector.load %arg6[%196, %c0_55, %c0_56] : memref<8x2x32xf32, #tpu.memory_space<vmem>>, vector<1x2x32xf32>
    %198 = vector.shape_cast %197 : vector<1x2x32xf32> to vector<2x32xf32>
    %199 = vector.shape_cast %195 : vector<2x32xf32> to vector<1x2x32xf32>
    tpu.vector_store %arg6[%196, %c0_55, %c0_56], %199 {strides = array<i32>} : memref<8x2x32xf32, #tpu.memory_space<vmem>>, vector<1x2x32xf32>,
    %c5_i32 = arith.constant 5 : i32
    %200 = arith.index_cast %c5_i32 : i32 to index
    %c0_57 = arith.constant 0 : index
    %c0_58 = arith.constant 0 : index
    %201 = vector.load %arg9[%200, %c0_57, %c0_58] : memref<8x2x96xf32, #tpu.memory_space<vmem>>, vector<1x2x96xf32>
    %202 = vector.shape_cast %201 : vector<1x2x96xf32> to vector<2x96xf32>
    %203 = arith.truncf %195 : vector<2x32xf32> to vector<2x32xbf16>
    %cst_59 = arith.constant dense<0.000000e+00> : vector<2x96xf32>
    %204 = tpu.matmul %203, %12, %cst_59 {dimension_numbers = #tpu.dot_dimension_numbers<[1], [0], [0], [1], [0, 0, 1, 1], [], []>} : vector<2x32xbf16>, vector<32x96xbf16>, vector<2x96xf32> -> vector<2x96xf32>
    %205 = vector.broadcast %13 : vector<1x96xf32> to vector<2x96xf32>
    %206 = arith.addf %204, %205 : vector<2x96xf32>
    %207 = vector.extract_strided_slice %202 {offsets = [0, 0], sizes = [2, 32], strides = [1, 1]} : vector<2x96xf32> to vector<2x32xf32>
    %208 = vector.extract_strided_slice %206 {offsets = [0, 0], sizes = [2, 32], strides = [1, 1]} : vector<2x96xf32> to vector<2x32xf32>
    %209 = arith.addf %207, %208 : vector<2x32xf32>
    %210 = arith.negf %209 : vector<2x32xf32>
    %211 = math.exp %210 : vector<2x32xf32>
    %cst_60 = arith.constant 1.000000e+00 : f32
    %212 = vector.broadcast %cst_60 : f32 to vector<2x32xf32>
    %213 = arith.addf %212, %211 : vector<2x32xf32>
    %214 = arith.divf %212, %213 : vector<2x32xf32>
    %215 = vector.extract_strided_slice %202 {offsets = [0, 32], sizes = [2, 32], strides = [1, 1]} : vector<2x96xf32> to vector<2x32xf32>
    %216 = vector.extract_strided_slice %206 {offsets = [0, 32], sizes = [2, 32], strides = [1, 1]} : vector<2x96xf32> to vector<2x32xf32>
    %217 = arith.addf %215, %216 : vector<2x32xf32>
    %218 = arith.negf %217 : vector<2x32xf32>
    %219 = math.exp %218 : vector<2x32xf32>
    %cst_61 = arith.constant 1.000000e+00 : f32
    %220 = vector.broadcast %cst_61 : f32 to vector<2x32xf32>
    %221 = arith.addf %220, %219 : vector<2x32xf32>
    %222 = arith.divf %220, %221 : vector<2x32xf32>
    %223 = vector.extract_strided_slice %202 {offsets = [0, 64], sizes = [2, 32], strides = [1, 1]} : vector<2x96xf32> to vector<2x32xf32>
    %224 = vector.extract_strided_slice %206 {offsets = [0, 64], sizes = [2, 32], strides = [1, 1]} : vector<2x96xf32> to vector<2x32xf32>
    %225 = arith.mulf %214, %224 : vector<2x32xf32>
    %226 = arith.addf %223, %225 : vector<2x32xf32>
    %227 = math.tanh %226 : vector<2x32xf32>
    %cst_62 = arith.constant 1.000000e+00 : f32
    %228 = vector.broadcast %cst_62 : f32 to vector<2x32xf32>
    %229 = arith.subf %228, %222 : vector<2x32xf32>
    %230 = arith.mulf %229, %227 : vector<2x32xf32>
    %231 = arith.mulf %222, %195 : vector<2x32xf32>
    %232 = arith.addf %230, %231 : vector<2x32xf32>
    %233 = arith.index_cast %c5_i32 : i32 to index
    %c0_63 = arith.constant 0 : index
    %c0_64 = arith.constant 0 : index
    %234 = vector.load %arg6[%233, %c0_63, %c0_64] : memref<8x2x32xf32, #tpu.memory_space<vmem>>, vector<1x2x32xf32>
    %235 = vector.shape_cast %234 : vector<1x2x32xf32> to vector<2x32xf32>
    %236 = vector.shape_cast %232 : vector<2x32xf32> to vector<1x2x32xf32>
    tpu.vector_store %arg6[%233, %c0_63, %c0_64], %236 {strides = array<i32>} : memref<8x2x32xf32, #tpu.memory_space<vmem>>, vector<1x2x32xf32>,
    %c6_i32 = arith.constant 6 : i32
    %237 = arith.index_cast %c6_i32 : i32 to index
    %c0_65 = arith.constant 0 : index
    %c0_66 = arith.constant 0 : index
    %238 = vector.load %arg9[%237, %c0_65, %c0_66] : memref<8x2x96xf32, #tpu.memory_space<vmem>>, vector<1x2x96xf32>
    %239 = vector.shape_cast %238 : vector<1x2x96xf32> to vector<2x96xf32>
    %240 = arith.truncf %232 : vector<2x32xf32> to vector<2x32xbf16>
    %cst_67 = arith.constant dense<0.000000e+00> : vector<2x96xf32>
    %241 = tpu.matmul %240, %12, %cst_67 {dimension_numbers = #tpu.dot_dimension_numbers<[1], [0], [0], [1], [0, 0, 1, 1], [], []>} : vector<2x32xbf16>, vector<32x96xbf16>, vector<2x96xf32> -> vector<2x96xf32>
    %242 = vector.broadcast %13 : vector<1x96xf32> to vector<2x96xf32>
    %243 = arith.addf %241, %242 : vector<2x96xf32>
    %244 = vector.extract_strided_slice %239 {offsets = [0, 0], sizes = [2, 32], strides = [1, 1]} : vector<2x96xf32> to vector<2x32xf32>
    %245 = vector.extract_strided_slice %243 {offsets = [0, 0], sizes = [2, 32], strides = [1, 1]} : vector<2x96xf32> to vector<2x32xf32>
    %246 = arith.addf %244, %245 : vector<2x32xf32>
    %247 = arith.negf %246 : vector<2x32xf32>
    %248 = math.exp %247 : vector<2x32xf32>
    %cst_68 = arith.constant 1.000000e+00 : f32
    %249 = vector.broadcast %cst_68 : f32 to vector<2x32xf32>
    %250 = arith.addf %249, %248 : vector<2x32xf32>
    %251 = arith.divf %249, %250 : vector<2x32xf32>
    %252 = vector.extract_strided_slice %239 {offsets = [0, 32], sizes = [2, 32], strides = [1, 1]} : vector<2x96xf32> to vector<2x32xf32>
    %253 = vector.extract_strided_slice %243 {offsets = [0, 32], sizes = [2, 32], strides = [1, 1]} : vector<2x96xf32> to vector<2x32xf32>
    %254 = arith.addf %252, %253 : vector<2x32xf32>
    %255 = arith.negf %254 : vector<2x32xf32>
    %256 = math.exp %255 : vector<2x32xf32>
    %cst_69 = arith.constant 1.000000e+00 : f32
    %257 = vector.broadcast %cst_69 : f32 to vector<2x32xf32>
    %258 = arith.addf %257, %256 : vector<2x32xf32>
    %259 = arith.divf %257, %258 : vector<2x32xf32>
    %260 = vector.extract_strided_slice %239 {offsets = [0, 64], sizes = [2, 32], strides = [1, 1]} : vector<2x96xf32> to vector<2x32xf32>
    %261 = vector.extract_strided_slice %243 {offsets = [0, 64], sizes = [2, 32], strides = [1, 1]} : vector<2x96xf32> to vector<2x32xf32>
    %262 = arith.mulf %251, %261 : vector<2x32xf32>
    %263 = arith.addf %260, %262 : vector<2x32xf32>
    %264 = math.tanh %263 : vector<2x32xf32>
    %cst_70 = arith.constant 1.000000e+00 : f32
    %265 = vector.broadcast %cst_70 : f32 to vector<2x32xf32>
    %266 = arith.subf %265, %259 : vector<2x32xf32>
    %267 = arith.mulf %266, %264 : vector<2x32xf32>
    %268 = arith.mulf %259, %232 : vector<2x32xf32>
    %269 = arith.addf %267, %268 : vector<2x32xf32>
    %270 = arith.index_cast %c6_i32 : i32 to index
    %c0_71 = arith.constant 0 : index
    %c0_72 = arith.constant 0 : index
    %271 = vector.load %arg6[%270, %c0_71, %c0_72] : memref<8x2x32xf32, #tpu.memory_space<vmem>>, vector<1x2x32xf32>
    %272 = vector.shape_cast %271 : vector<1x2x32xf32> to vector<2x32xf32>
    %273 = vector.shape_cast %269 : vector<2x32xf32> to vector<1x2x32xf32>
    tpu.vector_store %arg6[%270, %c0_71, %c0_72], %273 {strides = array<i32>} : memref<8x2x32xf32, #tpu.memory_space<vmem>>, vector<1x2x32xf32>,
    %c7_i32 = arith.constant 7 : i32
    %274 = arith.index_cast %c7_i32 : i32 to index
    %c0_73 = arith.constant 0 : index
    %c0_74 = arith.constant 0 : index
    %275 = vector.load %arg9[%274, %c0_73, %c0_74] : memref<8x2x96xf32, #tpu.memory_space<vmem>>, vector<1x2x96xf32>
    %276 = vector.shape_cast %275 : vector<1x2x96xf32> to vector<2x96xf32>
    %277 = arith.truncf %269 : vector<2x32xf32> to vector<2x32xbf16>
    %cst_75 = arith.constant dense<0.000000e+00> : vector<2x96xf32>
    %278 = tpu.matmul %277, %12, %cst_75 {dimension_numbers = #tpu.dot_dimension_numbers<[1], [0], [0], [1], [0, 0, 1, 1], [], []>} : vector<2x32xbf16>, vector<32x96xbf16>, vector<2x96xf32> -> vector<2x96xf32>
    %279 = vector.broadcast %13 : vector<1x96xf32> to vector<2x96xf32>
    %280 = arith.addf %278, %279 : vector<2x96xf32>
    %281 = vector.extract_strided_slice %276 {offsets = [0, 0], sizes = [2, 32], strides = [1, 1]} : vector<2x96xf32> to vector<2x32xf32>
    %282 = vector.extract_strided_slice %280 {offsets = [0, 0], sizes = [2, 32], strides = [1, 1]} : vector<2x96xf32> to vector<2x32xf32>
    %283 = arith.addf %281, %282 : vector<2x32xf32>
    %284 = arith.negf %283 : vector<2x32xf32>
    %285 = math.exp %284 : vector<2x32xf32>
    %cst_76 = arith.constant 1.000000e+00 : f32
    %286 = vector.broadcast %cst_76 : f32 to vector<2x32xf32>
    %287 = arith.addf %286, %285 : vector<2x32xf32>
    %288 = arith.divf %286, %287 : vector<2x32xf32>
    %289 = vector.extract_strided_slice %276 {offsets = [0, 32], sizes = [2, 32], strides = [1, 1]} : vector<2x96xf32> to vector<2x32xf32>
    %290 = vector.extract_strided_slice %280 {offsets = [0, 32], sizes = [2, 32], strides = [1, 1]} : vector<2x96xf32> to vector<2x32xf32>
    %291 = arith.addf %289, %290 : vector<2x32xf32>
    %292 = arith.negf %291 : vector<2x32xf32>
    %293 = math.exp %292 : vector<2x32xf32>
    %cst_77 = arith.constant 1.000000e+00 : f32
    %294 = vector.broadcast %cst_77 : f32 to vector<2x32xf32>
    %295 = arith.addf %294, %293 : vector<2x32xf32>
    %296 = arith.divf %294, %295 : vector<2x32xf32>
    %297 = vector.extract_strided_slice %276 {offsets = [0, 64], sizes = [2, 32], strides = [1, 1]} : vector<2x96xf32> to vector<2x32xf32>
    %298 = vector.extract_strided_slice %280 {offsets = [0, 64], sizes = [2, 32], strides = [1, 1]} : vector<2x96xf32> to vector<2x32xf32>
    %299 = arith.mulf %288, %298 : vector<2x32xf32>
    %300 = arith.addf %297, %299 : vector<2x32xf32>
    %301 = math.tanh %300 : vector<2x32xf32>
    %cst_78 = arith.constant 1.000000e+00 : f32
    %302 = vector.broadcast %cst_78 : f32 to vector<2x32xf32>
    %303 = arith.subf %302, %296 : vector<2x32xf32>
    %304 = arith.mulf %303, %301 : vector<2x32xf32>
    %305 = arith.mulf %296, %269 : vector<2x32xf32>
    %306 = arith.addf %304, %305 : vector<2x32xf32>
    %307 = arith.index_cast %c7_i32 : i32 to index
    %c0_79 = arith.constant 0 : index
    %c0_80 = arith.constant 0 : index
    %308 = vector.load %arg6[%307, %c0_79, %c0_80] : memref<8x2x32xf32, #tpu.memory_space<vmem>>, vector<1x2x32xf32>
    %309 = vector.shape_cast %308 : vector<1x2x32xf32> to vector<2x32xf32>
    %310 = vector.shape_cast %306 : vector<2x32xf32> to vector<1x2x32xf32>
    tpu.vector_store %arg6[%307, %c0_79, %c0_80], %310 {strides = array<i32>} : memref<8x2x32xf32, #tpu.memory_space<vmem>>, vector<1x2x32xf32>,
    %c8_i32 = arith.constant 8 : i32
    %c0_81 = arith.constant 0 : index
    %c0_82 = arith.constant 0 : index
    %311 = vector.load %arg8[%c0_81, %c0_82] : memref<2x32xf32, #tpu.memory_space<vmem>>, vector<2x32xf32>
    tpu.vector_store %arg8[%c0_81, %c0_82], %306 {strides = array<i32>} : memref<2x32xf32, #tpu.memory_space<vmem>>, vector<2x32xf32>,
    %c0_i32_83 = arith.constant 0 : i32
    %312 = arith.cmpi eq, %arg0, %c0_i32_83 : i32
    %313 = arith.extui %312 : i1 to i32
    %c0_i32_84 = arith.constant 0 : i32
    %314 = arith.cmpi ne, %313, %c0_i32_84 : i32
    scf.if %314 {
      %c0_85 = arith.constant 0 : index
      %c0_86 = arith.constant 0 : index
      %315 = vector.load %arg7[%c0_85, %c0_86] : memref<2x32xf32, #tpu.memory_space<vmem>>, vector<2x32xf32>
      tpu.vector_store %arg7[%c0_85, %c0_86], %306 {strides = array<i32>} : memref<2x32xf32, #tpu.memory_space<vmem>>, vector<2x32xf32>,
    } else {
    }
    return
  }
  func.func @transform_0(%arg0: i32) -> (i32, i32, i32) {
    %c0_i32 = arith.constant 0 : i32
    %c0_i32_0 = arith.constant 0 : i32
    %c0_i32_1 = arith.constant 0 : i32
    return %arg0, %c0_i32, %c0_i32_0 : i32, i32, i32
  }
  func.func @transform_1(%arg0: i32) -> (i32, i32) {
    %c0_i32 = arith.constant 0 : i32
    %c0_i32_0 = arith.constant 0 : i32
    %c0_i32_1 = arith.constant 0 : i32
    return %c0_i32, %c0_i32_0 : i32, i32
  }
  func.func @transform_2(%arg0: i32) -> (i32, i32) {
    %c0_i32 = arith.constant 0 : i32
    %c0_i32_0 = arith.constant 0 : i32
    %c0_i32_1 = arith.constant 0 : i32
    return %c0_i32, %c0_i32_0 : i32, i32
  }
  func.func @transform_3(%arg0: i32) -> (i32, i32) {
    %c0_i32 = arith.constant 0 : i32
    %c0_i32_0 = arith.constant 0 : i32
    %c0_i32_1 = arith.constant 0 : i32
    return %c0_i32, %c0_i32_0 : i32, i32
  }
  func.func @transform_4(%arg0: i32) -> (i32, i32) {
    %c0_i32 = arith.constant 0 : i32
    %c0_i32_0 = arith.constant 0 : i32
    %c0_i32_1 = arith.constant 0 : i32
    return %c0_i32, %c0_i32_0 : i32, i32
  }
  func.func @transform_5(%arg0: i32) -> (i32, i32, i32) {
    %c0_i32 = arith.constant 0 : i32
    %c0_i32_0 = arith.constant 0 : i32
    %c0_i32_1 = arith.constant 0 : i32
    return %arg0, %c0_i32, %c0_i32_0 : i32, i32, i32
  }
  func.func @transform_6(%arg0: i32) -> (i32, i32) {
    %c0_i32 = arith.constant 0 : i32
    %c0_i32_0 = arith.constant 0 : i32
    %c0_i32_1 = arith.constant 0 : i32
    return %c0_i32, %c0_i32_0 : i32, i32
  }
}

</mosaic_0001>

<llo_original>
// kernel: tpu_custom_call.1
$region0: #{tpu_custom_call.1}
  #allocation0 [shape = 'u32[]', space=smem, size = 0x4, offset = 0x4, fixed_abs, tag = 'smem constant byte address 0x4 - core index']
  #allocation1 [shape = 'u32[144,128]{1,0:T(1,128)}', space=vmem, size = 0x12000, scoped, tag = 'internal scratch']
  #allocation2 [shape = 'f32[2,32]{1,0:T(2,128)}', space=vmem, size = 0x400, scoped, tag = 'scratch operand']
  #allocation3 [shape = 'f32[8,2,96]{2,1,0:T(2,128)}', space=vmem, size = 0x2000, scoped, tag = 'scratch operand']
  %s0 = inlined_call_operand.hbm [shape: bf16[8,2,32], index: 0, kind: input, shape index: {}]
  %s1 = inlined_call_operand.hbm [shape: bf16[32,96], index: 1, kind: input, shape index: {}]
  %s2 = inlined_call_operand.hbm [shape: bf16[32,96], index: 2, kind: input, shape index: {}]
  %s3 = inlined_call_operand.vmem [shape: f32[1,96], index: 3, kind: input, shape index: {}]
  %s4 = inlined_call_operand.vmem [shape: f32[1,96], index: 4, kind: input, shape index: {}]
  %s5 = inlined_call_operand.hbm [shape: f32[8,2,32], index: 5, kind: output, shape index: {0}]
  %s6 = inlined_call_operand.hbm [shape: f32[2,32], index: 6, kind: output, shape index: {1}]
  %7 = xla_tuple %s5, %s6
  %s8 = sld [smem:[#allocation0]]
  $region58: #{tpu_custom_call.1} parent=0
    _
  %s10 = ssub.s32 1, %s8
  %s11 = scalar_select 0, %s10, %s8
  $region1: #{tpu_custom_call.1} parent=0
    #allocation4 [shape = 'u8[4096]{0}', space=vmem, size = 0x1000, scoped, tag = 'input window, operand 0, single buffered']
    #allocation5 [shape = 's32[1]{0}', space=sflag, size = 0x4, scoped, tag = 'scoped memory for tpu_custom_call.1']
    #allocation6 [shape = 's32[1]{0}', space=sflag, size = 0x4, scoped, tag = 'scoped memory for tpu_custom_call.1']
    #allocation7 [shape = 'u8[8192]{0}', space=vmem, size = 0x2000, scoped, tag = 'input window, operand 1, single buffered']
    #allocation8 [shape = 's32[1]{0}', space=sflag, size = 0x4, scoped, tag = 'scoped memory for tpu_custom_call.1']
    #allocation9 [shape = 'u8[8192]{0}', space=vmem, size = 0x2000, scoped, tag = 'input window, operand 2, single buffered']
    #allocation10 [shape = 'u8[8192]{0}', space=vmem, size = 0x2000, scoped, tag = 'output window, operand 0, single buffered']
    #allocation11 [shape = 'u8[1024]{0}', space=vmem, size = 0x400, scoped, tag = 'output window, operand 1, single buffered']
    #allocation12 [shape = 's32[1]{0}', space=sflag, size = 0x4, scoped, tag = 'scoped memory for tpu_custom_call.1']
    %12 = vsyncpa [#allocation5], 0
    %13 = vsyncpa [#allocation8], 0
    %14 = vsyncpa [#allocation6], 0
    %15 = vsyncpa [#allocation12], 0
    // Predicated region
    $region2: #{tpu_custom_call.1} parent=1 // pred_check
      _
    $region3: #{tpu_custom_call.1} parent=1 // pred_check_branch
      %17 = sbr.rel (0) target = $region5
    $region4: #{tpu_custom_call.1} parent=1 // pred_region
      %s19 = ssub.s32 128, 128
      %20 = vsyncadd [#allocation5], %s19
      %s21 = sshll.u32 [#allocation4], 4
      %s22 = int_to_ptr.vmem [resolvable:$true] %s21
      %27 = dma.hbm_to_vmem [thread:$0]  %s0, 128, %s22, [#allocation5], 16, 16, 1
    $region5: #{tpu_custom_call.1} parent=1 // pred_fallthru
      _
    // Predicated region
    $region6: #{tpu_custom_call.1} parent=1 // pred_check
      _
    $region7: #{tpu_custom_call.1} parent=1 // pred_check_branch
      %29 = sbr.rel (0) target = $region9
    $region8: #{tpu_custom_call.1} parent=1 // pred_region
      %s31 = ssub.s32 256, 256
      %32 = vsyncadd [#allocation8], %s31
      %s33 = sshll.u32 [#allocation7], 4
      %s34 = int_to_ptr.vmem [resolvable:$true] %s33
      %39 = dma.hbm_to_vmem [thread:$0]  %s1, 256, %s34, [#allocation8], 64, 64, 4
    $region9: #{tpu_custom_call.1} parent=1 // pred_fallthru
      _
    // Predicated region
    $region10: #{tpu_custom_call.1} parent=1 // pred_check
      _
    $region11: #{tpu_custom_call.1} parent=1 // pred_check_branch
      %41 = sbr.rel (0) target = $region13
    $region12: #{tpu_custom_call.1} parent=1 // pred_region
      %s43 = ssub.s32 256, 256
      %44 = vsyncadd [#allocation8], %s43
      %s45 = sshll.u32 [#allocation9], 4
      %s46 = int_to_ptr.vmem [resolvable:$true] %s45
      %51 = dma.hbm_to_vmem [thread:$0]  %s2, 256, %s46, [#allocation8], 64, 64, 4
    $region13: #{tpu_custom_call.1} parent=1 // pred_fallthru
      _
    // Predicated region
    $region14: #{tpu_custom_call.1} parent=1 // pred_check
      _
    $region15: #{tpu_custom_call.1} parent=1 // pred_check_branch
      %53 = sbr.rel (0) target = $region17
    $region16: #{tpu_custom_call.1} parent=1 // pred_region
      _
    $region17: #{tpu_custom_call.1} parent=1 // pred_fallthru
      _
    // Predicated region
    $region18: #{tpu_custom_call.1} parent=1 // pred_check
      _
    $region19: #{tpu_custom_call.1} parent=1 // pred_check_branch
      %55 = sbr.rel (0) target = $region21
    $region20: #{tpu_custom_call.1} parent=1 // pred_region
      _
    $region21: #{tpu_custom_call.1} parent=1 // pred_fallthru
      _
    // Predicated region
    $region22: #{tpu_custom_call.1} parent=1 // pred_check
      _
    $region23: #{tpu_custom_call.1} parent=1 // pred_check_branch
      %57 = sbr.rel (0) target = $region25
    $region24: #{tpu_custom_call.1} parent=1 // pred_region
      %58 = dma.done [#allocation5], 128
    $region25: #{tpu_custom_call.1} parent=1 // pred_fallthru
      _
    // Predicated region
    $region26: #{tpu_custom_call.1} parent=1 // pred_check
      _
    $region27: #{tpu_custom_call.1} parent=1 // pred_check_branch
      %60 = sbr.rel (0) target = $region29
    $region28: #{tpu_custom_call.1} parent=1 // pred_region
      %61 = dma.done [#allocation8], 256
    $region29: #{tpu_custom_call.1} parent=1 // pred_fallthru
      _
    // Predicated region
    $region30: #{tpu_custom_call.1} parent=1 // pred_check
      _
    $region31: #{tpu_custom_call.1} parent=1 // pred_check_branch
      %63 = sbr.rel (0) target = $region33
    $region32: #{tpu_custom_call.1} parent=1 // pred_region
      %64 = dma.done [#allocation8], 256
    $region33: #{tpu_custom_call.1} parent=1 // pred_fallthru
      _
    %p66 = scmp.eq.s32.totalorder 0, 0
    // Predicated region
    $region34: #{tpu_custom_call.1} parent=1 // pred_check
      %p67 = pneg %p66
    $region35: #{tpu_custom_call.1} parent=1 // pred_check_branch
      %69 = sbr.rel (%p67) target = $region37
    $region36: #{tpu_custom_call.1} parent=1 // pred_region
      %vm70 = vcmask 254976
      %71 = vst.msk [vmem:[#allocation2] sm:$0x3] %vm70, 0.0
    $region37: #{tpu_custom_call.1} parent=1 // pred_fallthru
      _
    %v72 = vld [vmem:[#allocation4] sm:$0x1]
    %v73 = vld [vmem:[#allocation4 + $0x1] sm:$0x1]
    %v74 = vld [vmem:[#allocation4 + $0x2] sm:$0x1]
    %v75 = vld [vmem:[#allocation4 + $0x3] sm:$0x1]
    %v76 = vld [vmem:[#allocation4 + $0x4] sm:$0x1]
    %v77 = vld [vmem:[#allocation4 + $0x5] sm:$0x1]
    %v78 = vld [vmem:[#allocation4 + $0x6] sm:$0x1]
    %v79 = vld [vmem:[#allocation4 + $0x7] sm:$0x1]
    %v80 = vld [vmem:[#allocation7] sm:$0xf]
    %v81 = vld [vmem:[#allocation7 + $0x4] sm:$0xf]
    %v82 = vld [vmem:[#allocation7 + $0x8] sm:$0xf]
    %v83 = vld [vmem:[#allocation7 + $0xc] sm:$0xf]
    %v84 = vld [vmem:[%s3] sm:$0x1]
    %v86 = vlaneseq
    %v87 = vshrl.u32 %v86, 7
    %v88 = vsub.s32 0, %v87
    %v89 = vrot.slane %v84, %v88
    %v99 = vcombine.low %v72, %v73
    %v100 = vcombine.low %v74, %v75
    %v101 = vcombine.low %v76, %v77
    %v102 = vcombine.low %v78, %v79
    %v104 = vunpack.c.l.s4 1966171168
    %v105 = vunpack.c.0.s8 %v104
    %v106 = vlaneseq
    %v107 = vshrl.u32 %v106, 7
    %v108 = vsub.s32 %v105, %v107
    %v109 = vrot.slane %v99, %v108
    %v111 = vunpack.c.l.s4 1966171168
    %v112 = vunpack.c.0.s8 %v111
    %v113 = vlaneseq
    %v114 = vshrl.u32 %v113, 7
    %v115 = vsub.s32 %v112, %v114
    %v116 = vrot.slane %v100, %v115
    %v118 = vunpack.c.l.s4 1966171168
    %v119 = vunpack.c.0.s8 %v118
    %v120 = vlaneseq
    %v121 = vshrl.u32 %v120, 7
    %v122 = vsub.s32 %v119, %v121
    %v123 = vrot.slane %v101, %v122
    %v125 = vunpack.c.l.s4 1966171168
    %v126 = vunpack.c.0.s8 %v125
    %v127 = vlaneseq
    %v128 = vshrl.u32 %v127, 7
    %v129 = vsub.s32 %v126, %v128
    %v130 = vrot.slane %v102, %v129
    %v131 = vcombine.low %v109, %v116
    %v132 = vcombine.low %v123, %v130
    %v134 = vunpack.c.l.s4 1966171168
    %v135 = vunpack.c.0.s8 %v134
    %v136 = vlaneseq
    %v137 = vshrl.u32 %v136, 7
    %v138 = vsub.s32 %v135, %v137
    %v139 = vrot.slane %v131, %v138
    %v141 = vunpack.c.l.s4 1966171168
    %v142 = vunpack.c.0.s8 %v141
    %v143 = vlaneseq
    %v144 = vshrl.u32 %v143, 7
    %v145 = vsub.s32 %v142, %v144
    %v146 = vrot.slane %v132, %v145
    %v147 = vcombine.low %v139, %v146
    %v152 = vunpack.c.l.b16 %v80
    %v153 = vunpack.c.l.b16 %v81
    %v154 = vunpack.c.l.b16 %v82
    %v155 = vunpack.c.l.b16 %v83
    %v156 = vpack.c.b16 %v153, %v152
    %v157 = vpack.c.b16 %v155, %v154
    %vm160 = vcmask 261120
    %v162 = vsel %vm160, %v147, 0
    %164 = vmatprep.subr.bf16.mxu0 0
    %165 = vmatpush1.bf16.msra.mxu0 %v156
    %166 = vmatprep.subr.bf16.mxu0 0
    %167 = vmatpush1.bf16.msra.mxu0 %v157
    %168 = vmatprep.subr.bf16.mxu0 0
    %169 = vmatpush1.bf16.msra.mxu0 0
    %170 = vmatprep.subr.bf16.mxu0 0
    %171 = vmatpush1.bf16.msra.mxu0 0
    %172 = vmatprep.subr.bf16.mxu0 0
    %173 = vmatpush1.bf16.msra.mxu0 0
    %174 = vmatprep.subr.bf16.mxu0 0
    %175 = vmatpush1.bf16.msra.mxu0 0
    %176 = vmatprep.subr.bf16.mxu0 0
    %177 = vmatpush1.bf16.msra.mxu0 0
    %178 = vmatprep.subr.bf16.mxu0 0
    %179 = vmatpush1.bf16.msra.mxu0 0
    %180 = vmatprep.subr.bf16.mxu0 0
    %181 = vmatpush1.bf16.msra.mxu0 0
    %182 = vmatprep.subr.bf16.mxu0 0
    %183 = vmatpush1.bf16.msra.mxu0 0
    %184 = vmatprep.subr.bf16.mxu0 0
    %185 = vmatpush1.bf16.msra.mxu0 0
    %186 = vmatprep.subr.bf16.mxu0 0
    %187 = vmatpush1.bf16.msra.mxu0 0
    %188 = vmatprep.subr.bf16.mxu0 0
    %189 = vmatpush1.bf16.msra.mxu0 0
    %190 = vmatprep.subr.bf16.mxu0 0
    %191 = vmatpush1.bf16.msra.mxu0 0
    %192 = vmatprep.subr.bf16.mxu0 0
    %193 = vmatpush1.bf16.msra.mxu0 0
    %194 = vmatprep.subr.bf16.mxu0 0
    %195 = vmatpush1.bf16.msra.mxu0 0
    %196 = vmatprep.mubr.bf16.mxu0 0
    %197 = vmatmul.mubr.bf16.gmra.mrb[0].mxu0 %v162
    %v198 = vpop.f32.mrb[0].mxu0
    %v199 = vadd.f32 %v89, %v198
    %v200 = vpop.f32.mrb[0].mxu0
    %v201 = vpop.f32.mrb[0].mxu0
    %v202 = vadd.f32 %v89, %v201
    %v203 = vpop.f32.mrb[0].mxu0
    %204 = vdwg.mxu0
    %v207 = vcombine.high %v199, %v199
    %v209 = vunpack.c.l.s4 1983009808
    %v210 = vunpack.c.0.s8 %v209
    %v211 = vlaneseq
    %v212 = vshrl.u32 %v211, 7
    %v213 = vsub.s32 %v210, %v212
    %v214 = vrot.slane %v199, %v213
    %v216 = vunpack.c.l.s4 1983009808
    %v217 = vunpack.c.0.s8 %v216
    %v218 = vlaneseq
    %v219 = vshrl.u32 %v218, 7
    %v220 = vsub.s32 %v217, %v219
    %v221 = vrot.slane %v207, %v220
    %v222 = vcombine.high %v214, %v214
    %v223 = vcombine.high %v221, %v221
    %v224 = vcombine.high %v202, %v202
    %v226 = vunpack.c.l.s4 1983009808
    %v227 = vunpack.c.0.s8 %v226
    %v228 = vlaneseq
    %v229 = vshrl.u32 %v228, 7
    %v230 = vsub.s32 %v227, %v229
    %v231 = vrot.slane %v202, %v230
    %v233 = vunpack.c.l.s4 1983009808
    %v234 = vunpack.c.0.s8 %v233
    %v235 = vlaneseq
    %v236 = vshrl.u32 %v235, 7
    %v237 = vsub.s32 %v234, %v236
    %v238 = vrot.slane %v224, %v237
    %v239 = vcombine.high %v231, %v231
    %v240 = vcombine.high %v238, %v238
    %vm249 = vcmask 779264
    %250 = vst.msk [vmem:[#allocation3] sm:$0x3] %vm249, %v214
    %251 = vst.msk [vmem:[#allocation3 + $0x2] sm:$0x3] %vm249, %v222
    %252 = vst.msk [vmem:[#allocation3 + $0x4] sm:$0x3] %vm249, %v221
    %253 = vst.msk [vmem:[#allocation3 + $0x6] sm:$0x3] %vm249, %v223
    %254 = vst.msk [vmem:[#allocation3 + $0x8] sm:$0x3] %vm249, %v231
    %255 = vst.msk [vmem:[#allocation3 + $0xa] sm:$0x3] %vm249, %v239
    %256 = vst.msk [vmem:[#allocation3 + $0xc] sm:$0x3] %vm249, %v238
    %257 = vst.msk [vmem:[#allocation3 + $0xe] sm:$0x3] %vm249, %v240
    %v258 = vld [vmem:[#allocation9] sm:$0xf]
    %v259 = vld [vmem:[#allocation9 + $0x4] sm:$0xf]
    %v260 = vld [vmem:[#allocation9 + $0x8] sm:$0xf]
    %v261 = vld [vmem:[#allocation9 + $0xc] sm:$0xf]
    %v262 = vld [vmem:[%s4] sm:$0x1]
    %v263 = vld [vmem:[#allocation2] sm:$0x3]
    %v264 = vld [vmem:[#allocation3] sm:$0x3]
    %v265 = vpack.c.bf16 %v263, %v263
    %v267 = vlaneseq
    %v268 = vshrl.u32 %v267, 7
    %v269 = vsub.s32 0, %v268
    %v270 = vrot.slane %v262, %v269
    %v276 = vunpack.c.l.b16 %v258
    %v277 = vunpack.c.l.b16 %v259
    %v278 = vunpack.c.l.b16 %v260
    %v279 = vunpack.c.l.b16 %v261
    %v280 = vpack.c.b16 %v277, %v276
    %v281 = vpack.c.b16 %v279, %v278
    %v285 = vsel %vm160, %v265, 0
    %287 = vmatprep.subr.bf16.mxu0 0
    %288 = vmatpush1.bf16.msra.mxu0 %v280
    %289 = vmatprep.subr.bf16.mxu0 0
    %290 = vmatpush1.bf16.msra.mxu0 %v281
    %291 = vmatprep.subr.bf16.mxu0 0
    %292 = vmatpush1.bf16.msra.mxu0 0
    %293 = vmatprep.subr.bf16.mxu0 0
    %294 = vmatpush1.bf16.msra.mxu0 0
    %295 = vmatprep.subr.bf16.mxu0 0
    %296 = vmatpush1.bf16.msra.mxu0 0
    %297 = vmatprep.subr.bf16.mxu0 0
    %298 = vmatpush1.bf16.msra.mxu0 0
    %299 = vmatprep.subr.bf16.mxu0 0
    %300 = vmatpush1.bf16.msra.mxu0 0
    %301 = vmatprep.subr.bf16.mxu0 0
    %302 = vmatpush1.bf16.msra.mxu0 0
    %303 = vmatprep.subr.bf16.mxu0 0
    %304 = vmatpush1.bf16.msra.mxu0 0
    %305 = vmatprep.subr.bf16.mxu0 0
    %306 = vmatpush1.bf16.msra.mxu0 0
    %307 = vmatprep.subr.bf16.mxu0 0
    %308 = vmatpush1.bf16.msra.mxu0 0
    %309 = vmatprep.subr.bf16.mxu0 0
    %310 = vmatpush1.bf16.msra.mxu0 0
    %311 = vmatprep.subr.bf16.mxu0 0
    %312 = vmatpush1.bf16.msra.mxu0 0
    %313 = vmatprep.subr.bf16.mxu0 0
    %314 = vmatpush1.bf16.msra.mxu0 0
    %315 = vmatprep.subr.bf16.mxu0 0
    %316 = vmatpush1.bf16.msra.mxu0 0
    %317 = vmatprep.subr.bf16.mxu0 0
    %318 = vmatpush1.bf16.msra.mxu0 0
    %319 = vmatprep.mubr.bf16.mxu0 0
    %320 = vmatmul.mubr.bf16.gmra.mrb[0].mxu0 %v285
    %v321 = vpop.f32.mrb[0].mxu0
    %v322 = vadd.f32 %v270, %v321
    %v323 = vpop.f32.mrb[0].mxu0
    %v324 = vpop.f32.mrb[0].mxu0
    %v325 = vpop.f32.mrb[0].mxu0
    %326 = vdwg.mxu0
    %v327 = vadd.f32 %v264, %v322
    %v328 = vxor.u32 %v327, 2147483648
    %v329 = vmul.f32 %v328, 1.442695
    %v330 = vpow.pop %v329
    %v331 = vadd.f32 %v330, 1.0
    %v332 = vrcp.pop %v331
    %v333 = vmul.f32 1.0, %v332
    %335 = vrot.lane.b32.xlu0 %v322, 64
    %v336 = vpop.permute.xlu0 %335
    %v338 = vmul.f32 %v333, %v336
    %340 = vrot.lane.b32.xlu0 %v338, 64
    %v341 = vpop.permute.xlu0 %340
    %v343 = vadd.f32 %v264, %v341
    %v344 = vtanh.pop %v343
    %v345 = vsub.f32 1.0, %v333
    %347 = vrot.lane.b32.xlu0 %v344, 96
    %v348 = vpop.permute.xlu0 %347
    %v350 = vmul.f32 %v345, %v348
    %352 = vrot.lane.b32.xlu0 %v263, 32
    %v353 = vpop.permute.xlu0 %352
    %v355 = vmul.f32 %v333, %v353
    %v356 = vadd.f32 %v350, %v355
    %358 = vrot.lane.b32.xlu0 %v356, 96
    %v359 = vpop.permute.xlu0 %358
    %vm361 = vcmask 254976
    %362 = vst.msk [vmem:[#allocation10] sm:$0x3] %vm361, %v359
    %s363 = scalar_lea.vmem [#allocation3], 2
    %v364 = vld [vmem:[%s363] sm:$0x3]
    %v365 = vpack.c.bf16 %v356, %v356
    %367 = vrot.lane.b32.xlu0 %v365, 96
    %v368 = vpop.permute.xlu0 %367
    %v370 = vsel %vm160, %v368, 0
    %372 = vmatprep.subr.bf16.mxu0 0
    %373 = vmatpush1.bf16.msra.mxu0 %v280
    %374 = vmatprep.subr.bf16.mxu0 0
    %375 = vmatpush1.bf16.msra.mxu0 %v281
    %376 = vmatprep.subr.bf16.mxu0 0
    %377 = vmatpush1.bf16.msra.mxu0 0
    %378 = vmatprep.subr.bf16.mxu0 0
    %379 = vmatpush1.bf16.msra.mxu0 0
    %380 = vmatprep.subr.bf16.mxu0 0
    %381 = vmatpush1.bf16.msra.mxu0 0
    %382 = vmatprep.subr.bf16.mxu0 0
    %383 = vmatpush1.bf16.msra.mxu0 0
    %384 = vmatprep.subr.bf16.mxu0 0
    %385 = vmatpush1.bf16.msra.mxu0 0
    %386 = vmatprep.subr.bf16.mxu0 0
    %387 = vmatpush1.bf16.msra.mxu0 0
    %388 = vmatprep.subr.bf16.mxu0 0
    %389 = vmatpush1.bf16.msra.mxu0 0
    %390 = vmatprep.subr.bf16.mxu0 0
    %391 = vmatpush1.bf16.msra.mxu0 0
    %392 = vmatprep.subr.bf16.mxu0 0
    %393 = vmatpush1.bf16.msra.mxu0 0
    %394 = vmatprep.subr.bf16.mxu0 0
    %395 = vmatpush1.bf16.msra.mxu0 0
    %396 = vmatprep.subr.bf16.mxu0 0
    %397 = vmatpush1.bf16.msra.mxu0 0
    %398 = vmatprep.subr.bf16.mxu0 0
    %399 = vmatpush1.bf16.msra.mxu0 0
    %400 = vmatprep.subr.bf16.mxu0 0
    %401 = vmatpush1.bf16.msra.mxu0 0
    %402 = vmatprep.subr.bf16.mxu0 0
    %403 = vmatpush1.bf16.msra.mxu0 0
    %404 = vmatprep.mubr.bf16.mxu0 0
    %405 = vmatmul.mubr.bf16.gmra.mrb[0].mxu0 %v370
    %v406 = vpop.f32.mrb[0].mxu0
    %v407 = vadd.f32 %v270, %v406
    %v408 = vpop.f32.mrb[0].mxu0
    %v409 = vpop.f32.mrb[0].mxu0
    %v410 = vpop.f32.mrb[0].mxu0
    %411 = vdwg.mxu0
    %v412 = vadd.f32 %v364, %v407
    %v413 = vxor.u32 %v412, 2147483648
    %v414 = vmul.f32 %v413, 1.442695
    %v415 = vpow.pop %v414
    %v416 = vadd.f32 %v415, 1.0
    %v417 = vrcp.pop %v416
    %v418 = vmul.f32 1.0, %v417
    %420 = vrot.lane.b32.xlu0 %v407, 64
    %v421 = vpop.permute.xlu0 %420
    %v423 = vmul.f32 %v418, %v421
    %425 = vrot.lane.b32.xlu0 %v423, 64
    %v426 = vpop.permute.xlu0 %425
    %v428 = vadd.f32 %v364, %v426
    %v429 = vtanh.pop %v428
    %v430 = vsub.f32 1.0, %v418
    %432 = vrot.lane.b32.xlu0 %v429, 96
    %v433 = vpop.permute.xlu0 %432
    %v435 = vmul.f32 %v430, %v433
    %v436 = vmul.f32 %v418, %v356
    %v437 = vadd.f32 %v435, %v436
    %439 = vrot.lane.b32.xlu0 %v437, 96
    %v440 = vpop.permute.xlu0 %439
    %s442 = scalar_lea.vmem [#allocation10], 2
    %443 = vst.msk [vmem:[%s442] sm:$0x3] %vm361, %v440
    %s444 = scalar_lea.vmem [#allocation3], 4
    %v445 = vld [vmem:[%s444] sm:$0x3]
    %v446 = vpack.c.bf16 %v437, %v437
    %448 = vrot.lane.b32.xlu0 %v446, 96
    %v449 = vpop.permute.xlu0 %448
    %v451 = vsel %vm160, %v449, 0
    %453 = vmatprep.subr.bf16.mxu0 0
    %454 = vmatpush1.bf16.msra.mxu0 %v280
    %455 = vmatprep.subr.bf16.mxu0 0
    %456 = vmatpush1.bf16.msra.mxu0 %v281
    %457 = vmatprep.subr.bf16.mxu0 0
    %458 = vmatpush1.bf16.msra.mxu0 0
    %459 = vmatprep.subr.bf16.mxu0 0
    %460 = vmatpush1.bf16.msra.mxu0 0
    %461 = vmatprep.subr.bf16.mxu0 0
    %462 = vmatpush1.bf16.msra.mxu0 0
    %463 = vmatprep.subr.bf16.mxu0 0
    %464 = vmatpush1.bf16.msra.mxu0 0
    %465 = vmatprep.subr.bf16.mxu0 0
    %466 = vmatpush1.bf16.msra.mxu0 0
    %467 = vmatprep.subr.bf16.mxu0 0
    %468 = vmatpush1.bf16.msra.mxu0 0
    %469 = vmatprep.subr.bf16.mxu0 0
    %470 = vmatpush1.bf16.msra.mxu0 0
    %471 = vmatprep.subr.bf16.mxu0 0
    %472 = vmatpush1.bf16.msra.mxu0 0
    %473 = vmatprep.subr.bf16.mxu0 0
    %474 = vmatpush1.bf16.msra.mxu0 0
    %475 = vmatprep.subr.bf16.mxu0 0
    %476 = vmatpush1.bf16.msra.mxu0 0
    %477 = vmatprep.subr.bf16.mxu0 0
    %478 = vmatpush1.bf16.msra.mxu0 0
    %479 = vmatprep.subr.bf16.mxu0 0
    %480 = vmatpush1.bf16.msra.mxu0 0
    %481 = vmatprep.subr.bf16.mxu0 0
    %482 = vmatpush1.bf16.msra.mxu0 0
    %483 = vmatprep.subr.bf16.mxu0 0
    %484 = vmatpush1.bf16.msra.mxu0 0
    %485 = vmatprep.mubr.bf16.mxu0 0
    %486 = vmatmul.mubr.bf16.gmra.mrb[0].mxu0 %v451
    %v487 = vpop.f32.mrb[0].mxu0
    %v488 = vadd.f32 %v270, %v487
    %v489 = vpop.f32.mrb[0].mxu0
    %v490 = vpop.f32.mrb[0].mxu0
    %v491 = vpop.f32.mrb[0].mxu0
    %492 = vdwg.mxu0
    %v493 = vadd.f32 %v445, %v488
    %v494 = vxor.u32 %v493, 2147483648
    %v495 = vmul.f32 %v494, 1.442695
    %v496 = vpow.pop %v495
    %v497 = vadd.f32 %v496, 1.0
    %v498 = vrcp.pop %v497
    %v499 = vmul.f32 1.0, %v498
    %501 = vrot.lane.b32.xlu0 %v488, 64
    %v502 = vpop.permute.xlu0 %501
    %v504 = vmul.f32 %v499, %v502
    %506 = vrot.lane.b32.xlu0 %v504, 64
    %v507 = vpop.permute.xlu0 %506
    %v509 = vadd.f32 %v445, %v507
    %v510 = vtanh.pop %v509
    %v511 = vsub.f32 1.0, %v499
    %513 = vrot.lane.b32.xlu0 %v510, 96
    %v514 = vpop.permute.xlu0 %513
    %v516 = vmul.f32 %v511, %v514
    %v517 = vmul.f32 %v499, %v437
    %v518 = vadd.f32 %v516, %v517
    %520 = vrot.lane.b32.xlu0 %v518, 96
    %v521 = vpop.permute.xlu0 %520
    %s523 = scalar_lea.vmem [#allocation10], 4
    %524 = vst.msk [vmem:[%s523] sm:$0x3] %vm361, %v521
    %s525 = scalar_lea.vmem [#allocation3], 6
    %v526 = vld [vmem:[%s525] sm:$0x3]
    %v527 = vpack.c.bf16 %v518, %v518
    %529 = vrot.lane.b32.xlu0 %v527, 96
    %v530 = vpop.permute.xlu0 %529
    %v532 = vsel %vm160, %v530, 0
    %534 = vmatprep.subr.bf16.mxu0 0
    %535 = vmatpush1.bf16.msra.mxu0 %v280
    %536 = vmatprep.subr.bf16.mxu0 0
    %537 = vmatpush1.bf16.msra.mxu0 %v281
    %538 = vmatprep.subr.bf16.mxu0 0
    %539 = vmatpush1.bf16.msra.mxu0 0
    %540 = vmatprep.subr.bf16.mxu0 0
    %541 = vmatpush1.bf16.msra.mxu0 0
    %542 = vmatprep.subr.bf16.mxu0 0
    %543 = vmatpush1.bf16.msra.mxu0 0
    %544 = vmatprep.subr.bf16.mxu0 0
    %545 = vmatpush1.bf16.msra.mxu0 0
    %546 = vmatprep.subr.bf16.mxu0 0
    %547 = vmatpush1.bf16.msra.mxu0 0
    %548 = vmatprep.subr.bf16.mxu0 0
    %549 = vmatpush1.bf16.msra.mxu0 0
    %550 = vmatprep.subr.bf16.mxu0 0
    %551 = vmatpush1.bf16.msra.mxu0 0
    %552 = vmatprep.subr.bf16.mxu0 0
    %553 = vmatpush1.bf16.msra.mxu0 0
    %554 = vmatprep.subr.bf16.mxu0 0
    %555 = vmatpush1.bf16.msra.mxu0 0
    %556 = vmatprep.subr.bf16.mxu0 0
    %557 = vmatpush1.bf16.msra.mxu0 0
    %558 = vmatprep.subr.bf16.mxu0 0
    %559 = vmatpush1.bf16.msra.mxu0 0
    %560 = vmatprep.subr.bf16.mxu0 0
    %561 = vmatpush1.bf16.msra.mxu0 0
    %562 = vmatprep.subr.bf16.mxu0 0
    %563 = vmatpush1.bf16.msra.mxu0 0
    %564 = vmatprep.subr.bf16.mxu0 0
    %565 = vmatpush1.bf16.msra.mxu0 0
    %566 = vmatprep.mubr.bf16.mxu0 0
    %567 = vmatmul.mubr.bf16.gmra.mrb[0].mxu0 %v532
    %v568 = vpop.f32.mrb[0].mxu0
    %v569 = vadd.f32 %v270, %v568
    %v570 = vpop.f32.mrb[0].mxu0
    %v571 = vpop.f32.mrb[0].mxu0
    %v572 = vpop.f32.mrb[0].mxu0
    %573 = vdwg.mxu0
    %v574 = vadd.f32 %v526, %v569
    %v575 = vxor.u32 %v574, 2147483648
    %v576 = vmul.f32 %v575, 1.442695
    %v577 = vpow.pop %v576
    %v578 = vadd.f32 %v577, 1.0
    %v579 = vrcp.pop %v578
    %v580 = vmul.f32 1.0, %v579
    %582 = vrot.lane.b32.xlu0 %v569, 64
    %v583 = vpop.permute.xlu0 %582
    %v585 = vmul.f32 %v580, %v583
    %587 = vrot.lane.b32.xlu0 %v585, 64
    %v588 = vpop.permute.xlu0 %587
    %v590 = vadd.f32 %v526, %v588
    %v591 = vtanh.pop %v590
    %v592 = vsub.f32 1.0, %v580
    %594 = vrot.lane.b32.xlu0 %v591, 96
    %v595 = vpop.permute.xlu0 %594
    %v597 = vmul.f32 %v592, %v595
    %v598 = vmul.f32 %v580, %v518
    %v599 = vadd.f32 %v597, %v598
    %601 = vrot.lane.b32.xlu0 %v599, 96
    %v602 = vpop.permute.xlu0 %601
    %s604 = scalar_lea.vmem [#allocation10], 6
    %605 = vst.msk [vmem:[%s604] sm:$0x3] %vm361, %v602
    %s606 = scalar_lea.vmem [#allocation3], 8
    %v607 = vld [vmem:[%s606] sm:$0x3]
    %v608 = vpack.c.bf16 %v599, %v599
    %610 = vrot.lane.b32.xlu0 %v608, 96
    %v611 = vpop.permute.xlu0 %610
    %v613 = vsel %vm160, %v611, 0
    %615 = vmatprep.subr.bf16.mxu0 0
    %616 = vmatpush1.bf16.msra.mxu0 %v280
    %617 = vmatprep.subr.bf16.mxu0 0
    %618 = vmatpush1.bf16.msra.mxu0 %v281
    %619 = vmatprep.subr.bf16.mxu0 0
    %620 = vmatpush1.bf16.msra.mxu0 0
    %621 = vmatprep.subr.bf16.mxu0 0
    %622 = vmatpush1.bf16.msra.mxu0 0
    %623 = vmatprep.subr.bf16.mxu0 0
    %624 = vmatpush1.bf16.msra.mxu0 0
    %625 = vmatprep.subr.bf16.mxu0 0
    %626 = vmatpush1.bf16.msra.mxu0 0
    %627 = vmatprep.subr.bf16.mxu0 0
    %628 = vmatpush1.bf16.msra.mxu0 0
    %629 = vmatprep.subr.bf16.mxu0 0
    %630 = vmatpush1.bf16.msra.mxu0 0
    %631 = vmatprep.subr.bf16.mxu0 0
    %632 = vmatpush1.bf16.msra.mxu0 0
    %633 = vmatprep.subr.bf16.mxu0 0
    %634 = vmatpush1.bf16.msra.mxu0 0
    %635 = vmatprep.subr.bf16.mxu0 0
    %636 = vmatpush1.bf16.msra.mxu0 0
    %637 = vmatprep.subr.bf16.mxu0 0
    %638 = vmatpush1.bf16.msra.mxu0 0
    %639 = vmatprep.subr.bf16.mxu0 0
    %640 = vmatpush1.bf16.msra.mxu0 0
    %641 = vmatprep.subr.bf16.mxu0 0
    %642 = vmatpush1.bf16.msra.mxu0 0
    %643 = vmatprep.subr.bf16.mxu0 0
    %644 = vmatpush1.bf16.msra.mxu0 0
    %645 = vmatprep.subr.bf16.mxu0 0
    %646 = vmatpush1.bf16.msra.mxu0 0
    %647 = vmatprep.mubr.bf16.mxu0 0
    %648 = vmatmul.mubr.bf16.gmra.mrb[0].mxu0 %v613
    %v649 = vpop.f32.mrb[0].mxu0
    %v650 = vadd.f32 %v270, %v649
    %v651 = vpop.f32.mrb[0].mxu0
    %v652 = vpop.f32.mrb[0].mxu0
    %v653 = vpop.f32.mrb[0].mxu0
    %654 = vdwg.mxu0
    %v655 = vadd.f32 %v607, %v650
    %v656 = vxor.u32 %v655, 2147483648
    %v657 = vmul.f32 %v656, 1.442695
    %v658 = vpow.pop %v657
    %v659 = vadd.f32 %v658, 1.0
    %v660 = vrcp.pop %v659
    %v661 = vmul.f32 1.0, %v660
    %663 = vrot.lane.b32.xlu0 %v650, 64
    %v664 = vpop.permute.xlu0 %663
    %v666 = vmul.f32 %v661, %v664
    %668 = vrot.lane.b32.xlu0 %v666, 64
    %v669 = vpop.permute.xlu0 %668
    %v671 = vadd.f32 %v607, %v669
    %v672 = vtanh.pop %v671
    %v673 = vsub.f32 1.0, %v661
    %675 = vrot.lane.b32.xlu0 %v672, 96
    %v676 = vpop.permute.xlu0 %675
    %v678 = vmul.f32 %v673, %v676
    %v679 = vmul.f32 %v661, %v599
    %v680 = vadd.f32 %v678, %v679
    %682 = vrot.lane.b32.xlu0 %v680, 96
    %v683 = vpop.permute.xlu0 %682
    %s685 = scalar_lea.vmem [#allocation10], 8
    %686 = vst.msk [vmem:[%s685] sm:$0x3] %vm361, %v683
    %s687 = scalar_lea.vmem [#allocation3], 10
    %v688 = vld [vmem:[%s687] sm:$0x3]
    %v689 = vpack.c.bf16 %v680, %v680
    %691 = vrot.lane.b32.xlu0 %v689, 96
    %v692 = vpop.permute.xlu0 %691
    %v694 = vsel %vm160, %v692, 0
    %696 = vmatprep.subr.bf16.mxu0 0
    %697 = vmatpush1.bf16.msra.mxu0 %v280
    %698 = vmatprep.subr.bf16.mxu0 0
    %699 = vmatpush1.bf16.msra.mxu0 %v281
    %700 = vmatprep.subr.bf16.mxu0 0
    %701 = vmatpush1.bf16.msra.mxu0 0
    %702 = vmatprep.subr.bf16.mxu0 0
    %703 = vmatpush1.bf16.msra.mxu0 0
    %704 = vmatprep.subr.bf16.mxu0 0
    %705 = vmatpush1.bf16.msra.mxu0 0
    %706 = vmatprep.subr.bf16.mxu0 0
    %707 = vmatpush1.bf16.msra.mxu0 0
    %708 = vmatprep.subr.bf16.mxu0 0
    %709 = vmatpush1.bf16.msra.mxu0 0
    %710 = vmatprep.subr.bf16.mxu0 0
    %711 = vmatpush1.bf16.msra.mxu0 0
    %712 = vmatprep.subr.bf16.mxu0 0
    %713 = vmatpush1.bf16.msra.mxu0 0
    %714 = vmatprep.subr.bf16.mxu0 0
    %715 = vmatpush1.bf16.msra.mxu0 0
    %716 = vmatprep.subr.bf16.mxu0 0
    %717 = vmatpush1.bf16.msra.mxu0 0
    %718 = vmatprep.subr.bf16.mxu0 0
    %719 = vmatpush1.bf16.msra.mxu0 0
    %720 = vmatprep.subr.bf16.mxu0 0
    %721 = vmatpush1.bf16.msra.mxu0 0
    %722 = vmatprep.subr.bf16.mxu0 0
    %723 = vmatpush1.bf16.msra.mxu0 0
    %724 = vmatprep.subr.bf16.mxu0 0
    %725 = vmatpush1.bf16.msra.mxu0 0
    %726 = vmatprep.subr.bf16.mxu0 0
    %727 = vmatpush1.bf16.msra.mxu0 0
    %728 = vmatprep.mubr.bf16.mxu0 0
    %729 = vmatmul.mubr.bf16.gmra.mrb[0].mxu0 %v694
    %v730 = vpop.f32.mrb[0].mxu0
    %v731 = vadd.f32 %v270, %v730
    %v732 = vpop.f32.mrb[0].mxu0
    %v733 = vpop.f32.mrb[0].mxu0
    %v734 = vpop.f32.mrb[0].mxu0
    %735 = vdwg.mxu0
    %v736 = vadd.f32 %v688, %v731
    %v737 = vxor.u32 %v736, 2147483648
    %v738 = vmul.f32 %v737, 1.442695
    %v739 = vpow.pop %v738
    %v740 = vadd.f32 %v739, 1.0
    %v741 = vrcp.pop %v740
    %v742 = vmul.f32 1.0, %v741
    %744 = vrot.lane.b32.xlu0 %v731, 64
    %v745 = vpop.permute.xlu0 %744
    %v747 = vmul.f32 %v742, %v745
    %749 = vrot.lane.b32.xlu0 %v747, 64
    %v750 = vpop.permute.xlu0 %749
    %v752 = vadd.f32 %v688, %v750
    %v753 = vtanh.pop %v752
    %v754 = vsub.f32 1.0, %v742
    %756 = vrot.lane.b32.xlu0 %v753, 96
    %v757 = vpop.permute.xlu0 %756
    %v759 = vmul.f32 %v754, %v757
    %v760 = vmul.f32 %v742, %v680
    %v761 = vadd.f32 %v759, %v760
    %763 = vrot.lane.b32.xlu0 %v761, 96
    %v764 = vpop.permute.xlu0 %763
    %s766 = scalar_lea.vmem [#allocation10], 10
    %767 = vst.msk [vmem:[%s766] sm:$0x3] %vm361, %v764
    %s768 = scalar_lea.vmem [#allocation3], 12
    %v769 = vld [vmem:[%s768] sm:$0x3]
    %v770 = vpack.c.bf16 %v761, %v761
    %772 = vrot.lane.b32.xlu0 %v770, 96
    %v773 = vpop.permute.xlu0 %772
    %v775 = vsel %vm160, %v773, 0
    %777 = vmatprep.subr.bf16.mxu0 0
    %778 = vmatpush1.bf16.msra.mxu0 %v280
    %779 = vmatprep.subr.bf16.mxu0 0
    %780 = vmatpush1.bf16.msra.mxu0 %v281
    %781 = vmatprep.subr.bf16.mxu0 0
    %782 = vmatpush1.bf16.msra.mxu0 0
    %783 = vmatprep.subr.bf16.mxu0 0
    %784 = vmatpush1.bf16.msra.mxu0 0
    %785 = vmatprep.subr.bf16.mxu0 0
    %786 = vmatpush1.bf16.msra.mxu0 0
    %787 = vmatprep.subr.bf16.mxu0 0
    %788 = vmatpush1.bf16.msra.mxu0 0
    %789 = vmatprep.subr.bf16.mxu0 0
    %790 = vmatpush1.bf16.msra.mxu0 0
    %791 = vmatprep.subr.bf16.mxu0 0
    %792 = vmatpush1.bf16.msra.mxu0 0
    %793 = vmatprep.subr.bf16.mxu0 0
    %794 = vmatpush1.bf16.msra.mxu0 0
    %795 = vmatprep.subr.bf16.mxu0 0
    %796 = vmatpush1.bf16.msra.mxu0 0
    %797 = vmatprep.subr.bf16.mxu0 0
    %798 = vmatpush1.bf16.msra.mxu0 0
    %799 = vmatprep.subr.bf16.mxu0 0
    %800 = vmatpush1.bf16.msra.mxu0 0
    %801 = vmatprep.subr.bf16.mxu0 0
    %802 = vmatpush1.bf16.msra.mxu0 0
    %803 = vmatprep.subr.bf16.mxu0 0
    %804 = vmatpush1.bf16.msra.mxu0 0
    %805 = vmatprep.subr.bf16.mxu0 0
    %806 = vmatpush1.bf16.msra.mxu0 0
    %807 = vmatprep.subr.bf16.mxu0 0
    %808 = vmatpush1.bf16.msra.mxu0 0
    %809 = vmatprep.mubr.bf16.mxu0 0
    %810 = vmatmul.mubr.bf16.gmra.mrb[0].mxu0 %v775
    %v811 = vpop.f32.mrb[0].mxu0
    %v812 = vadd.f32 %v270, %v811
    %v813 = vpop.f32.mrb[0].mxu0
    %v814 = vpop.f32.mrb[0].mxu0
    %v815 = vpop.f32.mrb[0].mxu0
    %816 = vdwg.mxu0
    %v817 = vadd.f32 %v769, %v812
    %v818 = vxor.u32 %v817, 2147483648
    %v819 = vmul.f32 %v818, 1.442695
    %v820 = vpow.pop %v819
    %v821 = vadd.f32 %v820, 1.0
    %v822 = vrcp.pop %v821
    %v823 = vmul.f32 1.0, %v822
    %825 = vrot.lane.b32.xlu0 %v812, 64
    %v826 = vpop.permute.xlu0 %825
    %v828 = vmul.f32 %v823, %v826
    %830 = vrot.lane.b32.xlu0 %v828, 64
    %v831 = vpop.permute.xlu0 %830
    %v833 = vadd.f32 %v769, %v831
    %v834 = vtanh.pop %v833
    %v835 = vsub.f32 1.0, %v823
    %837 = vrot.lane.b32.xlu0 %v834, 96
    %v838 = vpop.permute.xlu0 %837
    %v840 = vmul.f32 %v835, %v838
    %v841 = vmul.f32 %v823, %v761
    %v842 = vadd.f32 %v840, %v841
    %844 = vrot.lane.b32.xlu0 %v842, 96
    %v845 = vpop.permute.xlu0 %844
    %s847 = scalar_lea.vmem [#allocation10], 12
    %848 = vst.msk [vmem:[%s847] sm:$0x3] %vm361, %v845
    %s849 = scalar_lea.vmem [#allocation3], 14
    %v850 = vld [vmem:[%s849] sm:$0x3]
    %v851 = vpack.c.bf16 %v842, %v842
    %853 = vrot.lane.b32.xlu0 %v851, 96
    %v854 = vpop.permute.xlu0 %853
    %v856 = vsel %vm160, %v854, 0
    %858 = vmatprep.subr.bf16.mxu0 0
    %859 = vmatpush1.bf16.msra.mxu0 %v280
    %860 = vmatprep.subr.bf16.mxu0 0
    %861 = vmatpush1.bf16.msra.mxu0 %v281
    %862 = vmatprep.subr.bf16.mxu0 0
    %863 = vmatpush1.bf16.msra.mxu0 0
    %864 = vmatprep.subr.bf16.mxu0 0
    %865 = vmatpush1.bf16.msra.mxu0 0
    %866 = vmatprep.subr.bf16.mxu0 0
    %867 = vmatpush1.bf16.msra.mxu0 0
    %868 = vmatprep.subr.bf16.mxu0 0
    %869 = vmatpush1.bf16.msra.mxu0 0
    %870 = vmatprep.subr.bf16.mxu0 0
    %871 = vmatpush1.bf16.msra.mxu0 0
    %872 = vmatprep.subr.bf16.mxu0 0
    %873 = vmatpush1.bf16.msra.mxu0 0
    %874 = vmatprep.subr.bf16.mxu0 0
    %875 = vmatpush1.bf16.msra.mxu0 0
    %876 = vmatprep.subr.bf16.mxu0 0
    %877 = vmatpush1.bf16.msra.mxu0 0
    %878 = vmatprep.subr.bf16.mxu0 0
    %879 = vmatpush1.bf16.msra.mxu0 0
    %880 = vmatprep.subr.bf16.mxu0 0
    %881 = vmatpush1.bf16.msra.mxu0 0
    %882 = vmatprep.subr.bf16.mxu0 0
    %883 = vmatpush1.bf16.msra.mxu0 0
    %884 = vmatprep.subr.bf16.mxu0 0
    %885 = vmatpush1.bf16.msra.mxu0 0
    %886 = vmatprep.subr.bf16.mxu0 0
    %887 = vmatpush1.bf16.msra.mxu0 0
    %888 = vmatprep.subr.bf16.mxu0 0
    %889 = vmatpush1.bf16.msra.mxu0 0
    %890 = vmatprep.mubr.bf16.mxu0 0
    %891 = vmatmul.mubr.bf16.gmra.mrb[0].mxu0 %v856
    %v892 = vpop.f32.mrb[0].mxu0
    %v893 = vadd.f32 %v270, %v892
    %v894 = vpop.f32.mrb[0].mxu0
    %v895 = vpop.f32.mrb[0].mxu0
    %v896 = vpop.f32.mrb[0].mxu0
    %897 = vdwg.mxu0
    %v898 = vadd.f32 %v850, %v893
    %v899 = vxor.u32 %v898, 2147483648
    %v900 = vmul.f32 %v899, 1.442695
    %v901 = vpow.pop %v900
    %v902 = vadd.f32 %v901, 1.0
    %v903 = vrcp.pop %v902
    %v904 = vmul.f32 1.0, %v903
    %906 = vrot.lane.b32.xlu0 %v893, 64
    %v907 = vpop.permute.xlu0 %906
    %v909 = vmul.f32 %v904, %v907
    %911 = vrot.lane.b32.xlu0 %v909, 64
    %v912 = vpop.permute.xlu0 %911
    %v914 = vadd.f32 %v850, %v912
    %v915 = vtanh.pop %v914
    %v916 = vsub.f32 1.0, %v904
    %918 = vrot.lane.b32.xlu0 %v915, 96
    %v919 = vpop.permute.xlu0 %918
    %v921 = vmul.f32 %v916, %v919
    %v922 = vmul.f32 %v904, %v842
    %v923 = vadd.f32 %v921, %v922
    %925 = vrot.lane.b32.xlu0 %v923, 96
    %v926 = vpop.permute.xlu0 %925
    %s928 = scalar_lea.vmem [#allocation10], 14
    %929 = vst.msk [vmem:[%s928] sm:$0x3] %vm361, %v926
    %930 = vst.msk [vmem:[#allocation2] sm:$0x3] %vm361, %v926
    // Predicated region
    $region38: #{tpu_custom_call.1} parent=1 // pred_check
      %p931 = pneg %p66
    $region39: #{tpu_custom_call.1} parent=1 // pred_check_branch
      %933 = sbr.rel (%p931) target = $region41
    $region40: #{tpu_custom_call.1} parent=1 // pred_region
      %934 = vst.msk [vmem:[#allocation11] sm:$0x3] %vm361, %v926
    $region41: #{tpu_custom_call.1} parent=1 // pred_fallthru
      _
    // Predicated region
    $region42: #{tpu_custom_call.1} parent=1 // pred_check
      _
    $region43: #{tpu_custom_call.1} parent=1 // pred_check_branch
      %936 = sbr.rel (0) target = $region45
    $region44: #{tpu_custom_call.1} parent=1 // pred_region
      %s938 = ssub.s32 256, 256
      %939 = vsyncadd [#allocation6], %s938
      %s940 = sshll.u32 [#allocation10], 4
      %s941 = int_to_ptr.vmem [resolvable:$true] %s940
      %946 = dma.vmem_to_hbm [thread:$0]  %s941, 256, %s5, [#allocation6], 32, 32, 2
    $region45: #{tpu_custom_call.1} parent=1 // pred_fallthru
      _
    // Predicated region
    $region46: #{tpu_custom_call.1} parent=1 // pred_check
      _
    $region47: #{tpu_custom_call.1} parent=1 // pred_check_branch
      %948 = sbr.rel (0) target = $region49
    $region48: #{tpu_custom_call.1} parent=1 // pred_region
      %s950 = ssub.s32 32, 32
      %951 = vsyncadd [#allocation12], %s950
      %s953 = sshll.u32 [#allocation11], 4
      %s954 = int_to_ptr.vmem [resolvable:$true] %s953
      %956 = dma.vmem_to_hbm [thread:$0]  %s954, 32, %s6, [#allocation12]
    $region49: #{tpu_custom_call.1} parent=1 // pred_fallthru
      _
    // Predicated region
    $region50: #{tpu_custom_call.1} parent=1 // pred_check
      _
    $region51: #{tpu_custom_call.1} parent=1 // pred_check_branch
      %958 = sbr.rel (0) target = $region53
    $region52: #{tpu_custom_call.1} parent=1 // pred_region
      %959 = dma.done [#allocation6], 256
    $region53: #{tpu_custom_call.1} parent=1 // pred_fallthru
      _
    // Predicated region
    $region54: #{tpu_custom_call.1} parent=1 // pred_check
      _
    $region55: #{tpu_custom_call.1} parent=1 // pred_check_branch
      %961 = sbr.rel (0) target = $region57
    $region56: #{tpu_custom_call.1} parent=1 // pred_region
      %962 = dma.done [#allocation12], 32
    $region57: #{tpu_custom_call.1} parent=1 // pred_fallthru
      _
    %963 = vsyncpa [#allocation5], 1
    %964 = vsyncpa [#allocation8], 1
    %965 = vsyncpa [#allocation6], 1
    %966 = vsyncpa [#allocation12], 1

</llo_original>
